<compile_context>
chip_gen: v7x
topology: tpu7x:2x2x1
jax: 0.10.0
libtpu: 0.0.40
codegen_flags: <defaults>
</compile_context>

<pallas_src>
import functools

import jax
import jax.numpy as jnp
import numpy as np
from jax import lax
from jax.experimental import pallas as pl
from jax.experimental.pallas import tpu as pltpu


def _dsconv_kernel(xwin_ref, wdw_ref, wpw_ref, b1_ref, b2_ref, out_ref, *,
                   has_skip):
    """One (batch, row-tile) per grid step.

    xwin_ref : (1, TH + KH - 1, Wc + KW - 1, Cin)  padded window (input dtype)
    wdw_ref  : (KH, KW, Cin)   depthwise weights, BN1 scale folded in (f32)
    wpw_ref  : (Cin, Cout)     pointwise weights, BN2 scale folded in
    b1_ref   : (1, Cin)        BN1 bias (folded)
    b2_ref   : (1, Cout)       BN2 bias (folded)
    out_ref  : (1, TH, Wc, Cout)
    """
    _, th, tw, cout = out_ref.shape
    kh_sz, kw_sz, cin = wdw_ref.shape
    ph = (kh_sz - 1) // 2
    pw = (kw_sz - 1) // 2

    # --- depthwise conv: one full-width slab load per kh, kw shifts taken as
    #     static slices of the in-register slab; acc initialized from tap 0. ---
    acc = None
    for kh in range(kh_sz):
        slab = xwin_ref[0, kh:kh + th, :, :].astype(jnp.float32)  # (th, Wc+2pw, Cin)
        for kw in range(kw_sz):
            tap = slab[:, kw:kw + tw, :] * wdw_ref[kh, kw, :]
            acc = tap if acc is None else acc + tap

    # --- BN1 bias + ReLU (scale already folded into wdw) ---
    y = jnp.maximum(acc + b1_ref[0, :], 0.0)

    # --- pointwise 1x1 conv on the MXU (f32 accumulation).  The reshape is
    #     layout-preserving because tw % 8 == 0 (wrapper pads W). ---
    z = jnp.dot(y.reshape(th * tw, cin).astype(wpw_ref.dtype), wpw_ref[...],
                preferred_element_type=jnp.float32)
    z = (z + b2_ref[0, :]).reshape(th, tw, cout)

    # --- residual skip: interior of the already-resident padded window ---
    if has_skip:
        z = z + xwin_ref[0, ph:ph + th, pw:pw + tw, :].astype(jnp.float32)

    out_ref[0] = z.astype(out_ref.dtype)


def _vmem_limit_bytes():
    """Generation-aware VMEM ask (~60% of per-core capacity)."""
    try:
        cap = int(getattr(pltpu.get_tpu_info(), "vmem_capacity_bytes", 64 << 20))
    except Exception:
        cap = 64 << 20                       # conservative: v7x per-TC VMEM
    return max(32 << 20, min(int(0.6 * cap), 96 << 20))


def depthwise_separable_conv(x_nhwc, w_dw, w_pw, scale1, bias1, scale2, bias2,
                             *, rows_per_tile=None,
                             input_dtype=jnp.float32,
                             pw_matmul_dtype=jnp.bfloat16):
    """Fused depthwise-separable conv block (eval-mode BN folded to scale/bias).

    x_nhwc: (N, H, W, Cin) float32.  Returns (N, H, W, Cout) float32.
    Assumes the module's default config: stride=1, dilation=1, SAME padding,
    group_size=1 (depthwise), se_layer=None, pw_act=False, drop_path=0.
    """
    N, H, W, Cin = x_nhwc.shape
    KH, KW, wc = w_dw.shape
    assert wc == Cin
    Cout = w_pw.shape[1]
    ph, pw_ = (KH - 1) // 2, (KW - 1) // 2
    has_skip = (Cin == Cout)                 # stride==1, noskip=False in this config

    # Pad W up to a multiple of 8 so the in-kernel (th*W, Cin) reshape before the
    # MXU matmul is copy-free (real EfficientNet widths are 14, 7, ...).
    extra_w = (-W) % 8
    Wc = W + extra_w
    Wp = Wc + 2 * pw_

    in_dt = jnp.dtype(input_dtype)
    pw_dt = jnp.dtype(pw_matmul_dtype)

    # --- per-grid-step VMEM estimate: double-buffered in/out blocks + temporaries ---
    def step_vmem_bytes(th):
        thp = th + 2 * ph
        in_b = thp * Wp * Cin * in_dt.itemsize
        out_b = th * Wc * Cout * 4
        tmp = (th * Wp * Cin * 4            # f32 slab
               + 2 * th * Wc * Cin * 4      # acc + y (f32)
               + th * Wc * Cin * pw_dt.itemsize   # matmul lhs cast
               + th * Wc * Cout * 4)        # z (f32)
        return 2 * (in_b + out_b) + tmp

    vmem_limit = _vmem_limit_bytes()
    budget = int(0.7 * vmem_limit)

    if rows_per_tile is not None:
        th = int(rows_per_tile)
        assert H % th == 0, "H must be divisible by rows_per_tile"
    elif step_vmem_bytes(H) <= budget:
        th = H                               # whole padded image per step: no halo dup
    else:
        th = 1
        for cand in range(H - 1, 0, -1):
            if H % cand == 0 and step_vmem_bytes(cand) <= budget:
                th = cand
                break
    nH = H // th
    THp = th + 2 * ph

    # --- single padded input; dtype chosen for the HBM stream ---
    x_c = x_nhwc.astype(in_dt)
    x_pad = jnp.pad(x_c, ((0, 0), (ph, ph), (pw_, pw_ + extra_w), (0, 0)))
    if nH == 1:
        x_win = x_pad                                    # (N, H+2ph, Wp, Cin)
    else:
        # TODO(synk): for images too large for a single VMEM-resident window, use
        # memory_space=pl.ANY + in-kernel pltpu.make_async_copy of overlapping row
        # windows instead of this extra HBM gather pass.
        row_idx = (np.arange(nH)[:, None] * th
                   + np.arange(THp)[None, :]).reshape(-1)
        x_win = jnp.take(x_pad, jnp.asarray(row_idx), axis=1)

    # --- fold BN scales into the conv weights (exact algebra in eval mode) ---
    w_dw_f = (w_dw * scale1).astype(jnp.float32)                  # (KH, KW, Cin)
    w_pw_f = (w_pw * scale2[None, :]).astype(pw_dt)               # (Cin, Cout)
    b1 = bias1.reshape(1, Cin).astype(jnp.float32)
    b2 = bias2.reshape(1, Cout).astype(jnp.float32)

    kernel = functools.partial(_dsconv_kernel, has_skip=has_skip)

    flops = 2 * N * H * Wc * Cin * (KH * KW + Cout)
    bytes_accessed = (int(x_win.size) * in_dt.itemsize
                      + N * H * Wc * Cout * 4
                      + int(w_dw_f.size) * 4
                      + int(w_pw_f.size) * pw_dt.itemsize
                      + (Cin + Cout) * 4)

    out = pl.pallas_call(
        kernel,
        out_shape=jax.ShapeDtypeStruct((N, H, Wc, Cout), jnp.float32),
        grid_spec=pltpu.PrefetchScalarGridSpec(
            num_scalar_prefetch=0,
            grid=(N, nH),
            in_specs=[
                pl.BlockSpec((1, THp, Wp, Cin), lambda n, h: (n, h, 0, 0)),
                pl.BlockSpec((KH, KW, Cin), lambda n, h: (0, 0, 0)),
                pl.BlockSpec((Cin, Cout), lambda n, h: (0, 0)),
                pl.BlockSpec((1, Cin), lambda n, h: (0, 0)),
                pl.BlockSpec((1, Cout), lambda n, h: (0, 0)),
            ],
            out_specs=pl.BlockSpec((1, th, Wc, Cout), lambda n, h: (n, h, 0, 0)),
        ),
        compiler_params=pltpu.CompilerParams(
            dimension_semantics=("parallel", "parallel"),
            vmem_limit_bytes=vmem_limit),
        cost_estimate=pl.CostEstimate(
            flops=flops, transcendentals=0, bytes_accessed=bytes_accessed),
    )(x_win, w_dw_f, w_pw_f, b1, b2)

    if extra_w:
        out = out[:, :, :W, :]
    return out


def _reference(x_nhwc, w_dw, w_pw, scale1, bias1, scale2, bias2):
    """Pure-JAX f32 reference (same eval-mode semantics) for verification."""
    Cin = x_nhwc.shape[-1]
    dw_hwio = w_dw[:, :, None, :]            # (KH, KW, 1, Cin)
    y = lax.conv_general_dilated(
        x_nhwc, dw_hwio, window_strides=(1, 1), padding="SAME",
        dimension_numbers=("NHWC", "HWIO", "NHWC"),
        feature_group_count=Cin, precision=lax.Precision.HIGHEST)
    y = jnp.maximum(y * scale1 + bias1, 0.0)
    z = jnp.einsum("nhwc,cd->nhwd", y, w_pw, precision=lax.Precision.HIGHEST)
    z = z * scale2 + bias2
    return z + x_nhwc


if __name__ == "__main__":
    key = jax.random.PRNGKey(0)
    # Channels as a multiple of 128 (lane-dense stores, full MXU lanes),
    # spatial 16x16, batch 2 — representative EfficientNet DS-block slice.
    N, C, H, W = 2, 128, 16, 16
    KH = KW = 3
    Cout = C                                  # in_chs == out_chs -> skip active

    keys = jax.random.split(key, 8)
    # NCHW input (PyTorch convention), transposed to NHWC for the kernel.
    x_nchw = jax.random.normal(keys[0], (N, C, H, W), dtype=jnp.float32)
    x_nhwc = jnp.transpose(x_nchw, (0, 2, 3, 1))

    w_dw = jax.random.normal(keys[1], (KH, KW, C), dtype=jnp.float32) * 0.1
    w_pw = jax.random.normal(keys[2], (C, Cout), dtype=jnp.float32) * 0.1

    eps = 1e-5
    gamma1 = jax.random.normal(keys[3], (C,), dtype=jnp.float32) * 0.1 + 1.0
    beta1 = jax.random.normal(keys[4], (C,), dtype=jnp.float32) * 0.1
    rm1 = jnp.zeros((C,), jnp.float32)
    rv1 = jnp.ones((C,), jnp.float32)
    gamma2 = jax.random.normal(keys[5], (Cout,), dtype=jnp.float32) * 0.1 + 1.0
    beta2 = jax.random.normal(keys[6], (Cout,), dtype=jnp.float32) * 0.1
    rm2 = jnp.zeros((Cout,), jnp.float32)
    rv2 = jnp.ones((Cout,), jnp.float32)

    # Fold BN (inference) into per-channel scale/bias.
    scale1 = gamma1 / jnp.sqrt(rv1 + eps)
    bias1 = beta1 - rm1 * scale1
    scale2 = gamma2 / jnp.sqrt(rv2 + eps)
    bias2 = beta2 - rm2 * scale2

    ref = _reference(x_nhwc, w_dw, w_pw, scale1, bias1, scale2, bias2)

    # Faithful f32 path (f32 input stream + f32 MXU).
    out_f32 = depthwise_separable_conv(
        x_nhwc, w_dw, w_pw, scale1, bias1, scale2, bias2,
        input_dtype=jnp.float32, pw_matmul_dtype=jnp.float32)
    out_f32 = jax.block_until_ready(out_f32)
    np.testing.assert_allclose(np.asarray(out_f32), np.asarray(ref),
                               rtol=5e-3, atol=5e-3)

    # Fast path for v6e/v7x: bf16 input stream (halves HBM bytes) + bf16 MXU
    # inputs with f32 accumulation.
    out_fast = depthwise_separable_conv(
        x_nhwc, w_dw, w_pw, scale1, bias1, scale2, bias2,
        input_dtype=jnp.bfloat16, pw_matmul_dtype=jnp.bfloat16)
    out_fast = jax.block_until_ready(out_fast)
    np.testing.assert_allclose(np.asarray(out_fast), np.asarray(ref),
                               rtol=2e-2, atol=4e-2)

    print("KERNEL_OK")
</pallas_src>

<mosaic_0001>
module attributes {stable_mosaic.version = 11 : i64} {
  func.func @_dsconv_kernel(%arg0: i32, %arg1: i32, %arg2: memref<1x18x18x128xf32, #tpu.memory_space<vmem>>, %arg3: memref<3x3x128xf32, #tpu.memory_space<vmem>>, %arg4: memref<128x128xf32, #tpu.memory_space<vmem>>, %arg5: memref<1x128xf32, #tpu.memory_space<vmem>>, %arg6: memref<1x128xf32, #tpu.memory_space<vmem>>, %arg7: memref<1x16x16x128xf32, #tpu.memory_space<vmem>>) attributes {dimension_semantics = [#tpu.dimension_semantics<parallel>, #tpu.dimension_semantics<parallel>], iteration_bounds = array<i64: 2, 1>, scalar_prefetch = 0 : i64, scratch_operands = 0 : i64, tpu.core_type = #tpu.core_type<tc>, window_params = [{transform_indices = @transform_0, window_bounds = array<i64: 1, 18, 18, 128>}, {pipeline_mode = #tpu.pipeline_mode<synchronous>, transform_indices = @transform_1, window_bounds = array<i64: 3, 3, 128>}, {pipeline_mode = #tpu.pipeline_mode<synchronous>, transform_indices = @transform_2, window_bounds = array<i64: 128, 128>}, {pipeline_mode = #tpu.pipeline_mode<synchronous>, transform_indices = @transform_3, window_bounds = array<i64: 1, 128>}, {pipeline_mode = #tpu.pipeline_mode<synchronous>, transform_indices = @transform_4, window_bounds = array<i64: 1, 128>}, {transform_indices = @transform_5, window_bounds = array<i64: 1, 16, 16, 128>}]} {
    %c0 = arith.constant 0 : index
    %c0_0 = arith.constant 0 : index
    %c0_1 = arith.constant 0 : index
    %c0_2 = arith.constant 0 : index
    %0 = vector.load %arg2[%c0, %c0_0, %c0_1, %c0_2] : memref<1x18x18x128xf32, #tpu.memory_space<vmem>>, vector<1x16x18x128xf32>
    %1 = vector.shape_cast %0 : vector<1x16x18x128xf32> to vector<16x18x128xf32>
    %2 = vector.extract_strided_slice %1 {offsets = [0, 0, 0], sizes = [16, 16, 128], strides = [1, 1, 1]} : vector<16x18x128xf32> to vector<16x16x128xf32>
    %c0_3 = arith.constant 0 : index
    %c0_4 = arith.constant 0 : index
    %c0_5 = arith.constant 0 : index
    %3 = vector.load %arg3[%c0_3, %c0_4, %c0_5] : memref<3x3x128xf32, #tpu.memory_space<vmem>>, vector<1x1x128xf32>
    %4 = vector.shape_cast %3 : vector<1x1x128xf32> to vector<128xf32>
    %5 = vector.shape_cast %4 : vector<128xf32> to vector<1x1x128xf32>
    %6 = vector.broadcast %5 : vector<1x1x128xf32> to vector<16x16x128xf32>
    %7 = arith.mulf %2, %6 : vector<16x16x128xf32>
    %8 = vector.extract_strided_slice %1 {offsets = [0, 1, 0], sizes = [16, 16, 128], strides = [1, 1, 1]} : vector<16x18x128xf32> to vector<16x16x128xf32>
    %c0_6 = arith.constant 0 : index
    %c1 = arith.constant 1 : index
    %c0_7 = arith.constant 0 : index
    %9 = vector.load %arg3[%c0_6, %c1, %c0_7] : memref<3x3x128xf32, #tpu.memory_space<vmem>>, vector<1x1x128xf32>
    %10 = vector.shape_cast %9 : vector<1x1x128xf32> to vector<128xf32>
    %11 = vector.shape_cast %10 : vector<128xf32> to vector<1x1x128xf32>
    %12 = vector.broadcast %11 : vector<1x1x128xf32> to vector<16x16x128xf32>
    %13 = arith.mulf %8, %12 : vector<16x16x128xf32>
    %14 = arith.addf %7, %13 : vector<16x16x128xf32>
    %15 = vector.extract_strided_slice %1 {offsets = [0, 2, 0], sizes = [16, 16, 128], strides = [1, 1, 1]} : vector<16x18x128xf32> to vector<16x16x128xf32>
    %c0_8 = arith.constant 0 : index
    %c2 = arith.constant 2 : index
    %c0_9 = arith.constant 0 : index
    %16 = vector.load %arg3[%c0_8, %c2, %c0_9] : memref<3x3x128xf32, #tpu.memory_space<vmem>>, vector<1x1x128xf32>
    %17 = vector.shape_cast %16 : vector<1x1x128xf32> to vector<128xf32>
    %18 = vector.shape_cast %17 : vector<128xf32> to vector<1x1x128xf32>
    %19 = vector.broadcast %18 : vector<1x1x128xf32> to vector<16x16x128xf32>
    %20 = arith.mulf %15, %19 : vector<16x16x128xf32>
    %21 = arith.addf %14, %20 : vector<16x16x128xf32>
    %c0_10 = arith.constant 0 : index
    %c1_11 = arith.constant 1 : index
    %c0_12 = arith.constant 0 : index
    %c0_13 = arith.constant 0 : index
    %22 = vector.load %arg2[%c0_10, %c1_11, %c0_12, %c0_13] : memref<1x18x18x128xf32, #tpu.memory_space<vmem>>, vector<1x16x18x128xf32>
    %23 = vector.shape_cast %22 : vector<1x16x18x128xf32> to vector<16x18x128xf32>
    %24 = vector.extract_strided_slice %23 {offsets = [0, 0, 0], sizes = [16, 16, 128], strides = [1, 1, 1]} : vector<16x18x128xf32> to vector<16x16x128xf32>
    %c1_14 = arith.constant 1 : index
    %c0_15 = arith.constant 0 : index
    %c0_16 = arith.constant 0 : index
    %25 = vector.load %arg3[%c1_14, %c0_15, %c0_16] : memref<3x3x128xf32, #tpu.memory_space<vmem>>, vector<1x1x128xf32>
    %26 = vector.shape_cast %25 : vector<1x1x128xf32> to vector<128xf32>
    %27 = vector.shape_cast %26 : vector<128xf32> to vector<1x1x128xf32>
    %28 = vector.broadcast %27 : vector<1x1x128xf32> to vector<16x16x128xf32>
    %29 = arith.mulf %24, %28 : vector<16x16x128xf32>
    %30 = arith.addf %21, %29 : vector<16x16x128xf32>
    %31 = vector.extract_strided_slice %23 {offsets = [0, 1, 0], sizes = [16, 16, 128], strides = [1, 1, 1]} : vector<16x18x128xf32> to vector<16x16x128xf32>
    %c1_17 = arith.constant 1 : index
    %c1_18 = arith.constant 1 : index
    %c0_19 = arith.constant 0 : index
    %32 = vector.load %arg3[%c1_17, %c1_18, %c0_19] : memref<3x3x128xf32, #tpu.memory_space<vmem>>, vector<1x1x128xf32>
    %33 = vector.shape_cast %32 : vector<1x1x128xf32> to vector<128xf32>
    %34 = vector.shape_cast %33 : vector<128xf32> to vector<1x1x128xf32>
    %35 = vector.broadcast %34 : vector<1x1x128xf32> to vector<16x16x128xf32>
    %36 = arith.mulf %31, %35 : vector<16x16x128xf32>
    %37 = arith.addf %30, %36 : vector<16x16x128xf32>
    %38 = vector.extract_strided_slice %23 {offsets = [0, 2, 0], sizes = [16, 16, 128], strides = [1, 1, 1]} : vector<16x18x128xf32> to vector<16x16x128xf32>
    %c1_20 = arith.constant 1 : index
    %c2_21 = arith.constant 2 : index
    %c0_22 = arith.constant 0 : index
    %39 = vector.load %arg3[%c1_20, %c2_21, %c0_22] : memref<3x3x128xf32, #tpu.memory_space<vmem>>, vector<1x1x128xf32>
    %40 = vector.shape_cast %39 : vector<1x1x128xf32> to vector<128xf32>
    %41 = vector.shape_cast %40 : vector<128xf32> to vector<1x1x128xf32>
    %42 = vector.broadcast %41 : vector<1x1x128xf32> to vector<16x16x128xf32>
    %43 = arith.mulf %38, %42 : vector<16x16x128xf32>
    %44 = arith.addf %37, %43 : vector<16x16x128xf32>
    %c0_23 = arith.constant 0 : index
    %c2_24 = arith.constant 2 : index
    %c0_25 = arith.constant 0 : index
    %c0_26 = arith.constant 0 : index
    %45 = vector.load %arg2[%c0_23, %c2_24, %c0_25, %c0_26] : memref<1x18x18x128xf32, #tpu.memory_space<vmem>>, vector<1x16x18x128xf32>
    %46 = vector.shape_cast %45 : vector<1x16x18x128xf32> to vector<16x18x128xf32>
    %47 = vector.extract_strided_slice %46 {offsets = [0, 0, 0], sizes = [16, 16, 128], strides = [1, 1, 1]} : vector<16x18x128xf32> to vector<16x16x128xf32>
    %c2_27 = arith.constant 2 : index
    %c0_28 = arith.constant 0 : index
    %c0_29 = arith.constant 0 : index
    %48 = vector.load %arg3[%c2_27, %c0_28, %c0_29] : memref<3x3x128xf32, #tpu.memory_space<vmem>>, vector<1x1x128xf32>
    %49 = vector.shape_cast %48 : vector<1x1x128xf32> to vector<128xf32>
    %50 = vector.shape_cast %49 : vector<128xf32> to vector<1x1x128xf32>
    %51 = vector.broadcast %50 : vector<1x1x128xf32> to vector<16x16x128xf32>
    %52 = arith.mulf %47, %51 : vector<16x16x128xf32>
    %53 = arith.addf %44, %52 : vector<16x16x128xf32>
    %54 = vector.extract_strided_slice %46 {offsets = [0, 1, 0], sizes = [16, 16, 128], strides = [1, 1, 1]} : vector<16x18x128xf32> to vector<16x16x128xf32>
    %c2_30 = arith.constant 2 : index
    %c1_31 = arith.constant 1 : index
    %c0_32 = arith.constant 0 : index
    %55 = vector.load %arg3[%c2_30, %c1_31, %c0_32] : memref<3x3x128xf32, #tpu.memory_space<vmem>>, vector<1x1x128xf32>
    %56 = vector.shape_cast %55 : vector<1x1x128xf32> to vector<128xf32>
    %57 = vector.shape_cast %56 : vector<128xf32> to vector<1x1x128xf32>
    %58 = vector.broadcast %57 : vector<1x1x128xf32> to vector<16x16x128xf32>
    %59 = arith.mulf %54, %58 : vector<16x16x128xf32>
    %60 = arith.addf %53, %59 : vector<16x16x128xf32>
    %61 = vector.extract_strided_slice %46 {offsets = [0, 2, 0], sizes = [16, 16, 128], strides = [1, 1, 1]} : vector<16x18x128xf32> to vector<16x16x128xf32>
    %c2_33 = arith.constant 2 : index
    %c2_34 = arith.constant 2 : index
    %c0_35 = arith.constant 0 : index
    %62 = vector.load %arg3[%c2_33, %c2_34, %c0_35] : memref<3x3x128xf32, #tpu.memory_space<vmem>>, vector<1x1x128xf32>
    %63 = vector.shape_cast %62 : vector<1x1x128xf32> to vector<128xf32>
    %64 = vector.shape_cast %63 : vector<128xf32> to vector<1x1x128xf32>
    %65 = vector.broadcast %64 : vector<1x1x128xf32> to vector<16x16x128xf32>
    %66 = arith.mulf %61, %65 : vector<16x16x128xf32>
    %67 = arith.addf %60, %66 : vector<16x16x128xf32>
    %c0_36 = arith.constant 0 : index
    %c0_37 = arith.constant 0 : index
    %68 = vector.load %arg5[%c0_36, %c0_37] : memref<1x128xf32, #tpu.memory_space<vmem>>, vector<1x128xf32>
    %69 = vector.shape_cast %68 : vector<1x128xf32> to vector<128xf32>
    %70 = vector.shape_cast %69 : vector<128xf32> to vector<1x1x128xf32>
    %71 = vector.broadcast %70 : vector<1x1x128xf32> to vector<16x16x128xf32>
    %72 = arith.addf %67, %71 : vector<16x16x128xf32>
    %cst = arith.constant 0.000000e+00 : f32
    %73 = vector.broadcast %cst : f32 to vector<16x16x128xf32>
    %74 = arith.maximumf %72, %73 : vector<16x16x128xf32>
    %75 = vector.shape_cast %74 : vector<16x16x128xf32> to vector<256x128xf32>
    %c0_38 = arith.constant 0 : index
    %c0_39 = arith.constant 0 : index
    %76 = vector.load %arg4[%c0_38, %c0_39] : memref<128x128xf32, #tpu.memory_space<vmem>>, vector<128x128xf32>
    %cst_40 = arith.constant dense<0.000000e+00> : vector<256x128xf32>
    %77 = tpu.matmul %75, %76, %cst_40 {dimension_numbers = #tpu.dot_dimension_numbers<[1], [0], [0], [1], [0, 0, 1, 1], [], []>} : vector<256x128xf32>, vector<128x128xf32>, vector<256x128xf32> -> vector<256x128xf32>
    %c0_41 = arith.constant 0 : index
    %c0_42 = arith.constant 0 : index
    %78 = vector.load %arg6[%c0_41, %c0_42] : memref<1x128xf32, #tpu.memory_space<vmem>>, vector<1x128xf32>
    %79 = vector.shape_cast %78 : vector<1x128xf32> to vector<128xf32>
    %80 = vector.shape_cast %79 : vector<128xf32> to vector<1x128xf32>
    %81 = vector.broadcast %80 : vector<1x128xf32> to vector<256x128xf32>
    %82 = arith.addf %77, %81 : vector<256x128xf32>
    %83 = vector.shape_cast %82 : vector<256x128xf32> to vector<16x16x128xf32>
    %c0_43 = arith.constant 0 : index
    %c1_44 = arith.constant 1 : index
    %c1_45 = arith.constant 1 : index
    %c0_46 = arith.constant 0 : index
    %84 = vector.load %arg2[%c0_43, %c1_44, %c1_45, %c0_46] : memref<1x18x18x128xf32, #tpu.memory_space<vmem>>, vector<1x16x16x128xf32>
    %85 = vector.shape_cast %84 : vector<1x16x16x128xf32> to vector<16x16x128xf32>
    %86 = arith.addf %83, %85 : vector<16x16x128xf32>
    %c0_47 = arith.constant 0 : index
    %c0_48 = arith.constant 0 : index
    %c0_49 = arith.constant 0 : index
    %c0_50 = arith.constant 0 : index
    %87 = vector.load %arg7[%c0_47, %c0_48, %c0_49, %c0_50] : memref<1x16x16x128xf32, #tpu.memory_space<vmem>>, vector<1x16x16x128xf32>
    %88 = vector.shape_cast %87 : vector<1x16x16x128xf32> to vector<16x16x128xf32>
    %89 = vector.shape_cast %86 : vector<16x16x128xf32> to vector<1x16x16x128xf32>
    tpu.vector_store %arg7[%c0_47, %c0_48, %c0_49, %c0_50], %89 {strides = array<i32>} : memref<1x16x16x128xf32, #tpu.memory_space<vmem>>, vector<1x16x16x128xf32>,
    return
  }
  func.func @transform_0(%arg0: i32, %arg1: i32) -> (i32, i32, i32, i32) {
    %c0_i32 = arith.constant 0 : i32
    %c0_i32_0 = arith.constant 0 : i32
    %c0_i32_1 = arith.constant 0 : i32
    return %arg0, %arg1, %c0_i32, %c0_i32_0 : i32, i32, i32, i32
  }
  func.func @transform_1(%arg0: i32, %arg1: i32) -> (i32, i32, i32) {
    %c0_i32 = arith.constant 0 : i32
    %c0_i32_0 = arith.constant 0 : i32
    %c0_i32_1 = arith.constant 0 : i32
    %c0_i32_2 = arith.constant 0 : i32
    return %c0_i32, %c0_i32_0, %c0_i32_1 : i32, i32, i32
  }
  func.func @transform_2(%arg0: i32, %arg1: i32) -> (i32, i32) {
    %c0_i32 = arith.constant 0 : i32
    %c0_i32_0 = arith.constant 0 : i32
    %c0_i32_1 = arith.constant 0 : i32
    return %c0_i32, %c0_i32_0 : i32, i32
  }
  func.func @transform_3(%arg0: i32, %arg1: i32) -> (i32, i32) {
    %c0_i32 = arith.constant 0 : i32
    %c0_i32_0 = arith.constant 0 : i32
    %c0_i32_1 = arith.constant 0 : i32
    return %c0_i32, %c0_i32_0 : i32, i32
  }
  func.func @transform_4(%arg0: i32, %arg1: i32) -> (i32, i32) {
    %c0_i32 = arith.constant 0 : i32
    %c0_i32_0 = arith.constant 0 : i32
    %c0_i32_1 = arith.constant 0 : i32
    return %c0_i32, %c0_i32_0 : i32, i32
  }
  func.func @transform_5(%arg0: i32, %arg1: i32) -> (i32, i32, i32, i32) {
    %c0_i32 = arith.constant 0 : i32
    %c0_i32_0 = arith.constant 0 : i32
    %c0_i32_1 = arith.constant 0 : i32
    return %arg0, %arg1, %c0_i32, %c0_i32_0 : i32, i32, i32, i32
  }
}

</mosaic_0001>

<llo_original>
// kernel: tpu_custom_call.1
$region0: #{tpu_custom_call.1}
  #allocation0 [shape = 'u32[]', space=smem, size = 0x4, offset = 0x4, fixed_abs, tag = 'smem constant byte address 0x4 - core index']
  #allocation1 [shape = 'u32[144,128]{1,0:T(1,128)}', space=vmem, size = 0x12000, scoped, tag = 'internal scratch']
  %s0 = inlined_call_operand.vmem [shape: f32[2,18,18,128], index: 0, kind: input, shape index: {}]
  %s1 = inlined_call_operand.vmem [shape: f32[3,3,128], index: 1, kind: input, shape index: {}]
  %s2 = inlined_call_operand.vmem [shape: f32[128,128], index: 2, kind: input, shape index: {}]
  %s3 = inlined_call_operand.vmem [shape: f32[1,128], index: 3, kind: input, shape index: {}]
  %s4 = inlined_call_operand.vmem [shape: f32[1,128], index: 4, kind: input, shape index: {}]
  %s5 = inlined_call_operand.hbm [shape: f32[2,16,16,128], index: 5, kind: output, shape index: {}]
  %s6 = sld [smem:[#allocation0]]
  $region53: #{tpu_custom_call.1} parent=0
    _
  %s8 = ssub.s32 1, %s6
  %s9 = scalar_select 0, %s8, %s6
  $region1: #{tpu_custom_call.1} parent=0
    #allocation2 [shape = 'u8[262144]{0}', space=vmem, size = 0x40000, scoped, tag = 'output window, operand 0']
    #allocation3 [shape = 's32[2]{0}', space=sflag, size = 0x8, scoped, tag = 'scoped memory for tpu_custom_call.1']
    %10 = vsyncpa [#allocation3], 0
    %s11 = scalar_lea.sflag [#allocation3], 1
    %12 = vsyncpa %s11, 0
    loop: start=0, step=1, limit=4
    $region2: #{tpu_custom_call.1} parent=1 // loop_pre_header
      _
    $region3: #{tpu_custom_call.1} parent=1 // loop_header
      %s14 = sphi 0, %s18
      %p15 = scmp.ge.s32.totalorder %s14, 4
      %s21 = sphi 0, %s33
      %s22 = sphi 0, %s29
      %s23 = sphi 0, %s21
      %s24 = sphi 0, %s22
      %s25 = sphi 0, %s23
      %s26 = sphi 0, %s24
      %s38 = sphi 0, %s40
      %s41 = sphi 0, %s38
      %s42 = sphi 0, %s41
      %s58 = sphi 0, %s42
      %s62 = sphi 0, %s62
      %s64 = sphi 0, %s62
      %s65 = sphi 0, %s64
      %s79 = sphi 0, %s65
      %s83 = sphi 0, %s83
      %s85 = sphi 0, %s83
      %s86 = sphi 0, %s85
      %s100 = sphi 0, %s86
      %s104 = sphi 0, %s104
      %s106 = sphi 0, %s104
      %s107 = sphi 0, %s106
      %s121 = sphi 0, %s107
      %s125 = sphi 0, %s125
      %s127 = sphi 0, %s125
      %s128 = sphi 0, %s127
      %s142 = sphi 0, %s128
      %s150 = sphi 0, %s152
      %s153 = sphi 0, %s150
      %s154 = sphi 0, %s153
      %s170 = sphi 0, %s154
    $region4: #{tpu_custom_call.1} parent=1 // loop_header_branch
      %17 = sbr.rel (%p15) target = $region8
    $region5: #{tpu_custom_call.1} parent=1 // loop_body
      %s19 = ssub.s32 %s14, 1
      %s20 = ssub.s32 %s14, 2
      %s27 = sadd.s32 1, %s22
      %p28 = scmp.ge.s32.totalorder %s27, 1
      %s29 = scalar_select %p28, 0, %s27
      %s30 = sadd.s32 1, %s21
      %s31 = scalar_select %p28, %s30, %s21
      %p32 = scmp.ge.s32.totalorder %s31, 2
      %s33 = scalar_select %p32, 0, %s31
      %s34 = ssub.s32 %s21, %s33
      %s35 = ssub.s32 %s22, %s29
      %s36 = sor.u32 %s34, %s35
      %p37 = scmp.eq.s32.totalorder %s36, 0
      %s39 = sadd.s32 %s38, 1
      %s40 = scalar_select %p37, %s38, %s39
      %p43 = pneg %p37
      %p44 = scmp.eq.s32.totalorder %s14, 1
      %p45 = por %p43, %p44
      %p46 = scmp.ne.s32.totalorder %s38, %s41
      %p47 = scmp.eq.s32.totalorder %s14, 0
      %p48 = por %p46, %p47
      %p49 = scmp.ne.s32.totalorder %s38, %s41
      %p50 = scmp.eq.s32.totalorder %s19, 1
      %p51 = por %p49, %p50
      %p52 = scmp.ne.s32.totalorder %s41, %s42
      %p53 = scmp.eq.s32.totalorder %s19, 0
      %p54 = por %p52, %p53
      %p55 = scmp.ne.s32.totalorder %s41, %s42
      %p56 = scmp.eq.s32.totalorder %s20, 1
      %p57 = por %p55, %p56
      %p59 = scmp.ne.s32.totalorder %s42, %s58
      %p60 = scmp.eq.s32.totalorder %s20, 0
      %p61 = por %p59, %p60
      %s63 = sadd.s32 %s62, 1
      %p66 = scmp.eq.s32.totalorder %s14, 1
      %p67 = scmp.ne.s32.totalorder %s62, %s64
      %p68 = scmp.eq.s32.totalorder %s14, 0
      %p69 = por %p67, %p68
      %p70 = scmp.ne.s32.totalorder %s62, %s64
      %p71 = scmp.eq.s32.totalorder %s19, 1
      %p72 = por %p70, %p71
      %p73 = scmp.ne.s32.totalorder %s64, %s65
      %p74 = scmp.eq.s32.totalorder %s19, 0
      %p75 = por %p73, %p74
      %p76 = scmp.ne.s32.totalorder %s64, %s65
      %p77 = scmp.eq.s32.totalorder %s20, 1
      %p78 = por %p76, %p77
      %p80 = scmp.ne.s32.totalorder %s65, %s79
      %p81 = scmp.eq.s32.totalorder %s20, 0
      %p82 = por %p80, %p81
      %s84 = sadd.s32 %s83, 1
      %p87 = scmp.eq.s32.totalorder %s14, 1
      %p88 = scmp.ne.s32.totalorder %s83, %s85
      %p89 = scmp.eq.s32.totalorder %s14, 0
      %p90 = por %p88, %p89
      %p91 = scmp.ne.s32.totalorder %s83, %s85
      %p92 = scmp.eq.s32.totalorder %s19, 1
      %p93 = por %p91, %p92
      %p94 = scmp.ne.s32.totalorder %s85, %s86
      %p95 = scmp.eq.s32.totalorder %s19, 0
      %p96 = por %p94, %p95
      %p97 = scmp.ne.s32.totalorder %s85, %s86
      %p98 = scmp.eq.s32.totalorder %s20, 1
      %p99 = por %p97, %p98
      %p101 = scmp.ne.s32.totalorder %s86, %s100
      %p102 = scmp.eq.s32.totalorder %s20, 0
      %p103 = por %p101, %p102
      %s105 = sadd.s32 %s104, 1
      %p108 = scmp.eq.s32.totalorder %s14, 1
      %p109 = scmp.ne.s32.totalorder %s104, %s106
      %p110 = scmp.eq.s32.totalorder %s14, 0
      %p111 = por %p109, %p110
      %p112 = scmp.ne.s32.totalorder %s104, %s106
      %p113 = scmp.eq.s32.totalorder %s19, 1
      %p114 = por %p112, %p113
      %p115 = scmp.ne.s32.totalorder %s106, %s107
      %p116 = scmp.eq.s32.totalorder %s19, 0
      %p117 = por %p115, %p116
      %p118 = scmp.ne.s32.totalorder %s106, %s107
      %p119 = scmp.eq.s32.totalorder %s20, 1
      %p120 = por %p118, %p119
      %p122 = scmp.ne.s32.totalorder %s107, %s121
      %p123 = scmp.eq.s32.totalorder %s20, 0
      %p124 = por %p122, %p123
      %s126 = sadd.s32 %s125, 1
      %p129 = scmp.eq.s32.totalorder %s14, 1
      %p130 = scmp.ne.s32.totalorder %s125, %s127
      %p131 = scmp.eq.s32.totalorder %s14, 0
      %p132 = por %p130, %p131
      %p133 = scmp.ne.s32.totalorder %s125, %s127
      %p134 = scmp.eq.s32.totalorder %s19, 1
      %p135 = por %p133, %p134
      %p136 = scmp.ne.s32.totalorder %s127, %s128
      %p137 = scmp.eq.s32.totalorder %s19, 0
      %p138 = por %p136, %p137
      %p139 = scmp.ne.s32.totalorder %s127, %s128
      %p140 = scmp.eq.s32.totalorder %s20, 1
      %p141 = por %p139, %p140
      %p143 = scmp.ne.s32.totalorder %s128, %s142
      %p144 = scmp.eq.s32.totalorder %s20, 0
      %p145 = por %p143, %p144
      %s146 = ssub.s32 %s21, %s33
      %s147 = ssub.s32 %s22, %s29
      %s148 = sor.u32 %s146, %s147
      %p149 = scmp.eq.s32.totalorder %s148, 0
      %s151 = sadd.s32 %s150, 1
      %s152 = scalar_select %p149, %s150, %s151
      %p155 = pneg %p149
      %p156 = scmp.eq.s32.totalorder %s14, 1
      %p157 = por %p155, %p156
      %p158 = scmp.ne.s32.totalorder %s150, %s153
      %p159 = scmp.eq.s32.totalorder %s14, 0
      %p160 = por %p158, %p159
      %p161 = scmp.ne.s32.totalorder %s150, %s153
      %p162 = scmp.eq.s32.totalorder %s19, 1
      %p163 = por %p161, %p162
      %p164 = scmp.ne.s32.totalorder %s153, %s154
      %p165 = scmp.eq.s32.totalorder %s19, 0
      %p166 = por %p164, %p165
      %p167 = scmp.ne.s32.totalorder %s153, %s154
      %p168 = scmp.eq.s32.totalorder %s20, 1
      %p169 = por %p167, %p168
      %p171 = scmp.ne.s32.totalorder %s154, %s170
      %p172 = scmp.eq.s32.totalorder %s20, 0
      %p173 = por %p171, %p172
      %p174 = scmp.le.s32.totalorder 1, %s14
      %p175 = scmp.lt.s32.totalorder %s14, 3
      %p176 = pnand %p174, %p175
      %p177 = pneg %p176
      // Predicated region
      $region9: #{tpu_custom_call.1} parent=5 // pred_check
        _
      $region10: #{tpu_custom_call.1} parent=5 // pred_check_branch
        %179 = sbr.rel (%p176) target = $region12
      $region11: #{tpu_custom_call.1} parent=5 // pred_region
        %s180 = ssub.s32 %s14, 1
        // Predicated region
        $region13: #{tpu_custom_call.1} parent=11 // pred_check
          %p181 = pneg %p75
        $region14: #{tpu_custom_call.1} parent=11 // pred_check_branch
          %183 = sbr.rel (%p181) target = $region16
        $region15: #{tpu_custom_call.1} parent=11 // pred_region
          _
        $region16: #{tpu_custom_call.1} parent=11 // pred_fallthru
          _
        // Predicated region
        $region17: #{tpu_custom_call.1} parent=11 // pred_check
          %p184 = pneg %p96
        $region18: #{tpu_custom_call.1} parent=11 // pred_check_branch
          %186 = sbr.rel (%p184) target = $region20
        $region19: #{tpu_custom_call.1} parent=11 // pred_region
          _
        $region20: #{tpu_custom_call.1} parent=11 // pred_fallthru
          _
        // Predicated region
        $region21: #{tpu_custom_call.1} parent=11 // pred_check
          %p187 = pneg %p117
        $region22: #{tpu_custom_call.1} parent=11 // pred_check_branch
          %189 = sbr.rel (%p187) target = $region24
        $region23: #{tpu_custom_call.1} parent=11 // pred_region
          _
        $region24: #{tpu_custom_call.1} parent=11 // pred_fallthru
          _
        // Predicated region
        $region25: #{tpu_custom_call.1} parent=11 // pred_check
          %p190 = pneg %p138
        $region26: #{tpu_custom_call.1} parent=11 // pred_check_branch
          %192 = sbr.rel (%p190) target = $region28
        $region27: #{tpu_custom_call.1} parent=11 // pred_region
          _
        $region28: #{tpu_custom_call.1} parent=11 // pred_fallthru
          _
      $region12: #{tpu_custom_call.1} parent=5 // pred_fallthru
        _
      %p193 = scmp.lt.s32.totalorder %s14, 2
      // Predicated region
      $region29: #{tpu_custom_call.1} parent=5 // pred_check
        %p194 = pneg %p193
      $region30: #{tpu_custom_call.1} parent=5 // pred_check_branch
        %196 = sbr.rel (%p194) target = $region32
      $region31: #{tpu_custom_call.1} parent=5 // pred_region
        // Predicated region
        $region33: #{tpu_custom_call.1} parent=31 // pred_check
          %p197 = pneg %p48
        $region34: #{tpu_custom_call.1} parent=31 // pred_check_branch
          %199 = sbr.rel (%p197) target = $region36
        $region35: #{tpu_custom_call.1} parent=31 // pred_region
          %s200 = smul.u32 18, %s22
          %p201 = scmp.lt.s32.totalorder %s21, 1
          %s202 = scalar_select %p201, %s21, 1
          %p203 = scmp.lt.s32.totalorder %s200, 17
          %s204 = scalar_select %p203, %s200, 17
          %s205 = smul.addr %s204, 3
          %s206 = smul.addr %s202, 54
          %s207 = sadd.s32 %s205, %s206
          %s208 = smul.addr %s207, 8
          %s209 = scalar_lea.vmem %s0, %s208
          %s210 = smul.u32 18, %s22
        $region36: #{tpu_custom_call.1} parent=31 // pred_fallthru
          _
      $region32: #{tpu_custom_call.1} parent=5 // pred_fallthru
        _
      %p211 = scmp.le.s32.totalorder 1, %s14
      %p212 = scmp.lt.s32.totalorder %s14, 3
      %p213 = pnand %p211, %p212
      %p214 = pneg %p213
      // Predicated region
      $region37: #{tpu_custom_call.1} parent=5 // pred_check
        _
      $region38: #{tpu_custom_call.1} parent=5 // pred_check_branch
        %216 = sbr.rel (%p213) target = $region40
      $region39: #{tpu_custom_call.1} parent=5 // pred_region
        %s217 = ssub.s32 %s14, 1
        %s218 = smul.u32 18, %s24
        %p219 = scmp.lt.s32.totalorder %s23, 1
        %s220 = scalar_select %p219, %s23, 1
        %p221 = scmp.lt.s32.totalorder %s218, 17
        %s222 = scalar_select %p221, %s218, 17
        %s223 = smul.addr %s222, 3
        %s224 = smul.addr %s220, 54
        %s225 = sadd.s32 %s223, %s224
        %s226 = smul.addr %s225, 8
        %s227 = scalar_lea.vmem %s0, %s226
        %p228 = pneg %p54
        %p229 = pneg %p51
        %p230 = pneg %p75
        %p231 = pneg %p72
        %p232 = pneg %p96
        %p233 = pneg %p93
        %p234 = pneg %p117
        %p235 = pneg %p114
        %p236 = pneg %p138
        %p237 = pneg %p135
        %p238 = pneg %p166
        %p239 = pneg %p163
        %s240 = sand.u32 %s153, 1
        %s241 = scalar_lea.sflag [#allocation3], %s240
        %s242 = sand.u32 %s153, 1
        %s243 = smul.addr %s242, 256
        %s244 = scalar_lea.vmem [#allocation2], %s243
        %s245 = smul.u32 18, %s24
        %p246 = scmp.lt.s32.totalorder %s23, 1
        %s247 = scalar_select %p246, %s23, 1
        %p248 = scmp.lt.s32.totalorder %s245, 17
        %s249 = scalar_select %p248, %s245, 17
        %s250 = smul.addr %s249, 3
        %s251 = smul.addr %s247, 54
        %s252 = sadd.s32 %s250, %s251
        %s253 = smul.addr %s252, 8
        %s254 = scalar_lea.vmem %s0, %s253
        %s255 = smul.u32 18, %s24
        %s256 = smul.u32 16, %s24
        %v257 = vld [vmem:[%s254] sm:$0xff]
        %v258 = vld [vmem:[%s254 + $0x8] sm:$0xff]
        %v259 = vld [vmem:[%s254 + $0x10] sm:$0x3]
        %v260 = vld [vmem:[%s254 + $0x18] sm:$0xff]
        %v261 = vld [vmem:[%s254 + $0x20] sm:$0xff]
        %v262 = vld [vmem:[%s254 + $0x28] sm:$0x3]
        %v263 = vld [vmem:[%s254 + $0x30] sm:$0xff]
        %v264 = vld [vmem:[%s254 + $0x38] sm:$0xff]
        %v265 = vld [vmem:[%s254 + $0x40] sm:$0x3]
        %v266 = vld [vmem:[%s254 + $0x48] sm:$0xff]
        %v267 = vld [vmem:[%s254 + $0x50] sm:$0xff]
        %v268 = vld [vmem:[%s254 + $0x58] sm:$0x3]
        %v269 = vld [vmem:[%s254 + $0x60] sm:$0xff]
        %v270 = vld [vmem:[%s254 + $0x68] sm:$0xff]
        %v271 = vld [vmem:[%s254 + $0x70] sm:$0x3]
        %v272 = vld [vmem:[%s254 + $0x78] sm:$0xff]
        %v273 = vld [vmem:[%s254 + $0x80] sm:$0xff]
        %v274 = vld [vmem:[%s254 + $0x88] sm:$0x3]
        %v275 = vld [vmem:[%s254 + $0x90] sm:$0xff]
        %v276 = vld [vmem:[%s254 + $0x98] sm:$0xff]
        %v277 = vld [vmem:[%s254 + $0xa0] sm:$0x3]
        %v278 = vld [vmem:[%s254 + $0xa8] sm:$0xff]
        %v279 = vld [vmem:[%s254 + $0xb0] sm:$0xff]
        %v280 = vld [vmem:[%s254 + $0xb8] sm:$0x3]
        %v281 = vld [vmem:[%s254 + $0xc0] sm:$0xff]
        %v282 = vld [vmem:[%s254 + $0xc8] sm:$0xff]
        %v283 = vld [vmem:[%s254 + $0xd0] sm:$0x3]
        %v284 = vld [vmem:[%s254 + $0xd8] sm:$0xff]
        %v285 = vld [vmem:[%s254 + $0xe0] sm:$0xff]
        %v286 = vld [vmem:[%s254 + $0xe8] sm:$0x3]
        %v287 = vld [vmem:[%s254 + $0xf0] sm:$0xff]
        %v288 = vld [vmem:[%s254 + $0xf8] sm:$0xff]
        %v289 = vld [vmem:[%s254 + $0x100] sm:$0x3]
        %v290 = vld [vmem:[%s254 + $0x108] sm:$0xff]
        %v291 = vld [vmem:[%s254 + $0x110] sm:$0xff]
        %v292 = vld [vmem:[%s254 + $0x118] sm:$0x3]
        %v293 = vld [vmem:[%s254 + $0x120] sm:$0xff]
        %v294 = vld [vmem:[%s254 + $0x128] sm:$0xff]
        %v295 = vld [vmem:[%s254 + $0x130] sm:$0x3]
        %v296 = vld [vmem:[%s254 + $0x138] sm:$0xff]
        %v297 = vld [vmem:[%s254 + $0x140] sm:$0xff]
        %v298 = vld [vmem:[%s254 + $0x148] sm:$0x3]
        %v299 = vld [vmem:[%s254 + $0x150] sm:$0xff]
        %v300 = vld [vmem:[%s254 + $0x158] sm:$0xff]
        %v301 = vld [vmem:[%s254 + $0x160] sm:$0x3]
        %v302 = vld [vmem:[%s254 + $0x168] sm:$0xff]
        %v303 = vld [vmem:[%s254 + $0x170] sm:$0xff]
        %v304 = vld [vmem:[%s254 + $0x178] sm:$0x3]
        %v305 = vld [vmem:[%s1] sm:$0x1]
        %v306 = vlaneseq
        %v307 = vshrl.u32 %v306, 7
        %v308 = vsub.s32 0, %v307
        %v309 = vrot.slane %v305, %v308
        %v310 = vmul.f32 %v257, %v309
        %v311 = vmul.f32 %v258, %v309
        %v312 = vmul.f32 %v260, %v309
        %v313 = vmul.f32 %v261, %v309
        %v314 = vmul.f32 %v263, %v309
        %v315 = vmul.f32 %v264, %v309
        %v316 = vmul.f32 %v266, %v309
        %v317 = vmul.f32 %v267, %v309
        %v318 = vmul.f32 %v269, %v309
        %v319 = vmul.f32 %v270, %v309
        %v320 = vmul.f32 %v272, %v309
        %v321 = vmul.f32 %v273, %v309
        %v322 = vmul.f32 %v275, %v309
        %v323 = vmul.f32 %v276, %v309
        %v324 = vmul.f32 %v278, %v309
        %v325 = vmul.f32 %v279, %v309
        %v326 = vmul.f32 %v281, %v309
        %v327 = vmul.f32 %v282, %v309
        %v328 = vmul.f32 %v284, %v309
        %v329 = vmul.f32 %v285, %v309
        %v330 = vmul.f32 %v287, %v309
        %v331 = vmul.f32 %v288, %v309
        %v332 = vmul.f32 %v290, %v309
        %v333 = vmul.f32 %v291, %v309
        %v334 = vmul.f32 %v293, %v309
        %v335 = vmul.f32 %v294, %v309
        %v336 = vmul.f32 %v296, %v309
        %v337 = vmul.f32 %v297, %v309
        %v338 = vmul.f32 %v299, %v309
        %v339 = vmul.f32 %v300, %v309
        %v340 = vmul.f32 %v302, %v309
        %v341 = vmul.f32 %v303, %v309
        %v342 = vld [vmem:[%s1 + $0x1] sm:$0x1]
        %v343 = vlaneseq
        %v344 = vshrl.u32 %v343, 7
        %v345 = vsub.s32 0, %v344
        %v346 = vrot.slane %v342, %v345
        %v347 = vmul.f32 %v257, %v346
        %v348 = vmul.f32 %v258, %v346
        %v349 = vmul.f32 %v259, %v346
        %v350 = vmul.f32 %v260, %v346
        %v351 = vmul.f32 %v261, %v346
        %v352 = vmul.f32 %v262, %v346
        %v353 = vmul.f32 %v263, %v346
        %v354 = vmul.f32 %v264, %v346
        %v355 = vmul.f32 %v265, %v346
        %v356 = vmul.f32 %v266, %v346
        %v357 = vmul.f32 %v267, %v346
        %v358 = vmul.f32 %v268, %v346
        %v359 = vmul.f32 %v269, %v346
        %v360 = vmul.f32 %v270, %v346
        %v361 = vmul.f32 %v271, %v346
        %v362 = vmul.f32 %v272, %v346
        %v363 = vmul.f32 %v273, %v346
        %v364 = vmul.f32 %v274, %v346
        %v365 = vmul.f32 %v275, %v346
        %v366 = vmul.f32 %v276, %v346
        %v367 = vmul.f32 %v277, %v346
        %v368 = vmul.f32 %v278, %v346
        %v369 = vmul.f32 %v279, %v346
        %v370 = vmul.f32 %v280, %v346
        %v371 = vmul.f32 %v281, %v346
        %v372 = vmul.f32 %v282, %v346
        %v373 = vmul.f32 %v283, %v346
        %v374 = vmul.f32 %v284, %v346
        %v375 = vmul.f32 %v285, %v346
        %v376 = vmul.f32 %v286, %v346
        %v377 = vmul.f32 %v287, %v346
        %v378 = vmul.f32 %v288, %v346
        %v379 = vmul.f32 %v289, %v346
        %v380 = vmul.f32 %v290, %v346
        %v381 = vmul.f32 %v291, %v346
        %v382 = vmul.f32 %v292, %v346
        %v383 = vmul.f32 %v293, %v346
        %v384 = vmul.f32 %v294, %v346
        %v385 = vmul.f32 %v295, %v346
        %v386 = vmul.f32 %v296, %v346
        %v387 = vmul.f32 %v297, %v346
        %v388 = vmul.f32 %v298, %v346
        %v389 = vmul.f32 %v299, %v346
        %v390 = vmul.f32 %v300, %v346
        %v391 = vmul.f32 %v301, %v346
        %v392 = vmul.f32 %v302, %v346
        %v393 = vmul.f32 %v303, %v346
        %v394 = vmul.f32 %v304, %v346
        %vm443 = vcmask 1046528
        %v444 = vrot.slane %v347, 1
        %v445 = vrot.slane %v348, 1
        %v446 = vsel %vm443, %v444, %v445
        %v447 = vrot.slane %v349, 1
        %v448 = vsel %vm443, %v445, %v447
        %v449 = vrot.slane %v350, 1
        %v450 = vrot.slane %v351, 1
        %v451 = vsel %vm443, %v449, %v450
        %v452 = vrot.slane %v352, 1
        %v453 = vsel %vm443, %v450, %v452
        %v454 = vrot.slane %v353, 1
        %v455 = vrot.slane %v354, 1
        %v456 = vsel %vm443, %v454, %v455
        %v457 = vrot.slane %v355, 1
        %v458 = vsel %vm443, %v455, %v457
        %v459 = vrot.slane %v356, 1
        %v460 = vrot.slane %v357, 1
        %v461 = vsel %vm443, %v459, %v460
        %v462 = vrot.slane %v358, 1
        %v463 = vsel %vm443, %v460, %v462
        %v464 = vrot.slane %v359, 1
        %v465 = vrot.slane %v360, 1
        %v466 = vsel %vm443, %v464, %v465
        %v467 = vrot.slane %v361, 1
        %v468 = vsel %vm443, %v465, %v467
        %v469 = vrot.slane %v362, 1
        %v470 = vrot.slane %v363, 1
        %v471 = vsel %vm443, %v469, %v470
        %v472 = vrot.slane %v364, 1
        %v473 = vsel %vm443, %v470, %v472
        %v474 = vrot.slane %v365, 1
        %v475 = vrot.slane %v366, 1
        %v476 = vsel %vm443, %v474, %v475
        %v477 = vrot.slane %v367, 1
        %v478 = vsel %vm443, %v475, %v477
        %v479 = vrot.slane %v368, 1
        %v480 = vrot.slane %v369, 1
        %v481 = vsel %vm443, %v479, %v480
        %v482 = vrot.slane %v370, 1
        %v483 = vsel %vm443, %v480, %v482
        %v484 = vrot.slane %v371, 1
        %v485 = vrot.slane %v372, 1
        %v486 = vsel %vm443, %v484, %v485
        %v487 = vrot.slane %v373, 1
        %v488 = vsel %vm443, %v485, %v487
        %v489 = vrot.slane %v374, 1
        %v490 = vrot.slane %v375, 1
        %v491 = vsel %vm443, %v489, %v490
        %v492 = vrot.slane %v376, 1
        %v493 = vsel %vm443, %v490, %v492
        %v494 = vrot.slane %v377, 1
        %v495 = vrot.slane %v378, 1
        %v496 = vsel %vm443, %v494, %v495
        %v497 = vrot.slane %v379, 1
        %v498 = vsel %vm443, %v495, %v497
        %v499 = vrot.slane %v380, 1
        %v500 = vrot.slane %v381, 1
        %v501 = vsel %vm443, %v499, %v500
        %v502 = vrot.slane %v382, 1
        %v503 = vsel %vm443, %v500, %v502
        %v504 = vrot.slane %v383, 1
        %v505 = vrot.slane %v384, 1
        %v506 = vsel %vm443, %v504, %v505
        %v507 = vrot.slane %v385, 1
        %v508 = vsel %vm443, %v505, %v507
        %v509 = vrot.slane %v386, 1
        %v510 = vrot.slane %v387, 1
        %v511 = vsel %vm443, %v509, %v510
        %v512 = vrot.slane %v388, 1
        %v513 = vsel %vm443, %v510, %v512
        %v514 = vrot.slane %v389, 1
        %v515 = vrot.slane %v390, 1
        %v516 = vsel %vm443, %v514, %v515
        %v517 = vrot.slane %v391, 1
        %v518 = vsel %vm443, %v515, %v517
        %v519 = vrot.slane %v392, 1
        %v520 = vrot.slane %v393, 1
        %v521 = vsel %vm443, %v519, %v520
        %v522 = vrot.slane %v394, 1
        %v523 = vsel %vm443, %v520, %v522
        %v556 = vadd.f32 %v310, %v446
        %v557 = vadd.f32 %v311, %v448
        %v558 = vadd.f32 %v312, %v451
        %v559 = vadd.f32 %v313, %v453
        %v560 = vadd.f32 %v314, %v456
        %v561 = vadd.f32 %v315, %v458
        %v562 = vadd.f32 %v316, %v461
        %v563 = vadd.f32 %v317, %v463
        %v564 = vadd.f32 %v318, %v466
        %v565 = vadd.f32 %v319, %v468
        %v566 = vadd.f32 %v320, %v471
        %v567 = vadd.f32 %v321, %v473
        %v568 = vadd.f32 %v322, %v476
        %v569 = vadd.f32 %v323, %v478
        %v570 = vadd.f32 %v324, %v481
        %v571 = vadd.f32 %v325, %v483
        %v572 = vadd.f32 %v326, %v486
        %v573 = vadd.f32 %v327, %v488
        %v574 = vadd.f32 %v328, %v491
        %v575 = vadd.f32 %v329, %v493
        %v576 = vadd.f32 %v330, %v496
        %v577 = vadd.f32 %v331, %v498
        %v578 = vadd.f32 %v332, %v501
        %v579 = vadd.f32 %v333, %v503
        %v580 = vadd.f32 %v334, %v506
        %v581 = vadd.f32 %v335, %v508
        %v582 = vadd.f32 %v336, %v511
        %v583 = vadd.f32 %v337, %v513
        %v584 = vadd.f32 %v338, %v516
        %v585 = vadd.f32 %v339, %v518
        %v586 = vadd.f32 %v340, %v521
        %v587 = vadd.f32 %v341, %v523
        %v588 = vld [vmem:[%s1 + $0x2] sm:$0x1]
        %v589 = vlaneseq
        %v590 = vshrl.u32 %v589, 7
        %v591 = vsub.s32 0, %v590
        %v592 = vrot.slane %v588, %v591
        %v593 = vmul.f32 %v257, %v592
        %v594 = vmul.f32 %v258, %v592
        %v595 = vmul.f32 %v259, %v592
        %v596 = vmul.f32 %v260, %v592
        %v597 = vmul.f32 %v261, %v592
        %v598 = vmul.f32 %v262, %v592
        %v599 = vmul.f32 %v263, %v592
        %v600 = vmul.f32 %v264, %v592
        %v601 = vmul.f32 %v265, %v592
        %v602 = vmul.f32 %v266, %v592
        %v603 = vmul.f32 %v267, %v592
        %v604 = vmul.f32 %v268, %v592
        %v605 = vmul.f32 %v269, %v592
        %v606 = vmul.f32 %v270, %v592
        %v607 = vmul.f32 %v271, %v592
        %v608 = vmul.f32 %v272, %v592
        %v609 = vmul.f32 %v273, %v592
        %v610 = vmul.f32 %v274, %v592
        %v611 = vmul.f32 %v275, %v592
        %v612 = vmul.f32 %v276, %v592
        %v613 = vmul.f32 %v277, %v592
        %v614 = vmul.f32 %v278, %v592
        %v615 = vmul.f32 %v279, %v592
        %v616 = vmul.f32 %v280, %v592
        %v617 = vmul.f32 %v281, %v592
        %v618 = vmul.f32 %v282, %v592
        %v619 = vmul.f32 %v283, %v592
        %v620 = vmul.f32 %v284, %v592
        %v621 = vmul.f32 %v285, %v592
        %v622 = vmul.f32 %v286, %v592
        %v623 = vmul.f32 %v287, %v592
        %v624 = vmul.f32 %v288, %v592
        %v625 = vmul.f32 %v289, %v592
        %v626 = vmul.f32 %v290, %v592
        %v627 = vmul.f32 %v291, %v592
        %v628 = vmul.f32 %v292, %v592
        %v629 = vmul.f32 %v293, %v592
        %v630 = vmul.f32 %v294, %v592
        %v631 = vmul.f32 %v295, %v592
        %v632 = vmul.f32 %v296, %v592
        %v633 = vmul.f32 %v297, %v592
        %v634 = vmul.f32 %v298, %v592
        %v635 = vmul.f32 %v299, %v592
        %v636 = vmul.f32 %v300, %v592
        %v637 = vmul.f32 %v301, %v592
        %v638 = vmul.f32 %v302, %v592
        %v639 = vmul.f32 %v303, %v592
        %v640 = vmul.f32 %v304, %v592
        %vm689 = vcmask 1045504
        %v690 = vrot.slane %v593, 2
        %v691 = vrot.slane %v594, 2
        %v692 = vsel %vm689, %v690, %v691
        %v693 = vrot.slane %v595, 2
        %v694 = vsel %vm689, %v691, %v693
        %v695 = vrot.slane %v596, 2
        %v696 = vrot.slane %v597, 2
        %v697 = vsel %vm689, %v695, %v696
        %v698 = vrot.slane %v598, 2
        %v699 = vsel %vm689, %v696, %v698
        %v700 = vrot.slane %v599, 2
        %v701 = vrot.slane %v600, 2
        %v702 = vsel %vm689, %v700, %v701
        %v703 = vrot.slane %v601, 2
        %v704 = vsel %vm689, %v701, %v703
        %v705 = vrot.slane %v602, 2
        %v706 = vrot.slane %v603, 2
        %v707 = vsel %vm689, %v705, %v706
        %v708 = vrot.slane %v604, 2
        %v709 = vsel %vm689, %v706, %v708
        %v710 = vrot.slane %v605, 2
        %v711 = vrot.slane %v606, 2
        %v712 = vsel %vm689, %v710, %v711
        %v713 = vrot.slane %v607, 2
        %v714 = vsel %vm689, %v711, %v713
        %v715 = vrot.slane %v608, 2
        %v716 = vrot.slane %v609, 2
        %v717 = vsel %vm689, %v715, %v716
        %v718 = vrot.slane %v610, 2
        %v719 = vsel %vm689, %v716, %v718
        %v720 = vrot.slane %v611, 2
        %v721 = vrot.slane %v612, 2
        %v722 = vsel %vm689, %v720, %v721
        %v723 = vrot.slane %v613, 2
        %v724 = vsel %vm689, %v721, %v723
        %v725 = vrot.slane %v614, 2
        %v726 = vrot.slane %v615, 2
        %v727 = vsel %vm689, %v725, %v726
        %v728 = vrot.slane %v616, 2
        %v729 = vsel %vm689, %v726, %v728
        %v730 = vrot.slane %v617, 2
        %v731 = vrot.slane %v618, 2
        %v732 = vsel %vm689, %v730, %v731
        %v733 = vrot.slane %v619, 2
        %v734 = vsel %vm689, %v731, %v733
        %v735 = vrot.slane %v620, 2
        %v736 = vrot.slane %v621, 2
        %v737 = vsel %vm689, %v735, %v736
        %v738 = vrot.slane %v622, 2
        %v739 = vsel %vm689, %v736, %v738
        %v740 = vrot.slane %v623, 2
        %v741 = vrot.slane %v624, 2
        %v742 = vsel %vm689, %v740, %v741
        %v743 = vrot.slane %v625, 2
        %v744 = vsel %vm689, %v741, %v743
        %v745 = vrot.slane %v626, 2
        %v746 = vrot.slane %v627, 2
        %v747 = vsel %vm689, %v745, %v746
        %v748 = vrot.slane %v628, 2
        %v749 = vsel %vm689, %v746, %v748
        %v750 = vrot.slane %v629, 2
        %v751 = vrot.slane %v630, 2
        %v752 = vsel %vm689, %v750, %v751
        %v753 = vrot.slane %v631, 2
        %v754 = vsel %vm689, %v751, %v753
        %v755 = vrot.slane %v632, 2
        %v756 = vrot.slane %v633, 2
        %v757 = vsel %vm689, %v755, %v756
        %v758 = vrot.slane %v634, 2
        %v759 = vsel %vm689, %v756, %v758
        %v760 = vrot.slane %v635, 2
        %v761 = vrot.slane %v636, 2
        %v762 = vsel %vm689, %v760, %v761
        %v763 = vrot.slane %v637, 2
        %v764 = vsel %vm689, %v761, %v763
        %v765 = vrot.slane %v638, 2
        %v766 = vrot.slane %v639, 2
        %v767 = vsel %vm689, %v765, %v766
        %v768 = vrot.slane %v640, 2
        %v769 = vsel %vm689, %v766, %v768
        %v802 = vadd.f32 %v556, %v692
        %v803 = vadd.f32 %v557, %v694
        %v804 = vadd.f32 %v558, %v697
        %v805 = vadd.f32 %v559, %v699
        %v806 = vadd.f32 %v560, %v702
        %v807 = vadd.f32 %v561, %v704
        %v808 = vadd.f32 %v562, %v707
        %v809 = vadd.f32 %v563, %v709
        %v810 = vadd.f32 %v564, %v712
        %v811 = vadd.f32 %v565, %v714
        %v812 = vadd.f32 %v566, %v717
        %v813 = vadd.f32 %v567, %v719
        %v814 = vadd.f32 %v568, %v722
        %v815 = vadd.f32 %v569, %v724
        %v816 = vadd.f32 %v570, %v727
        %v817 = vadd.f32 %v571, %v729
        %v818 = vadd.f32 %v572, %v732
        %v819 = vadd.f32 %v573, %v734
        %v820 = vadd.f32 %v574, %v737
        %v821 = vadd.f32 %v575, %v739
        %v822 = vadd.f32 %v576, %v742
        %v823 = vadd.f32 %v577, %v744
        %v824 = vadd.f32 %v578, %v747
        %v825 = vadd.f32 %v579, %v749
        %v826 = vadd.f32 %v580, %v752
        %v827 = vadd.f32 %v581, %v754
        %v828 = vadd.f32 %v582, %v757
        %v829 = vadd.f32 %v583, %v759
        %v830 = vadd.f32 %v584, %v762
        %v831 = vadd.f32 %v585, %v764
        %v832 = vadd.f32 %v586, %v767
        %v833 = vadd.f32 %v587, %v769
        %s834 = scalar_lea.vmem %s254, 24
        %v835 = vld [vmem:[%s834] sm:$0xff]
        %v836 = vld [vmem:[%s834 + $0x8] sm:$0xff]
        %v837 = vld [vmem:[%s834 + $0x10] sm:$0x3]
        %v838 = vld [vmem:[%s834 + $0x18] sm:$0xff]
        %v839 = vld [vmem:[%s834 + $0x20] sm:$0xff]
        %v840 = vld [vmem:[%s834 + $0x28] sm:$0x3]
        %v841 = vld [vmem:[%s834 + $0x30] sm:$0xff]
        %v842 = vld [vmem:[%s834 + $0x38] sm:$0xff]
        %v843 = vld [vmem:[%s834 + $0x40] sm:$0x3]
        %v844 = vld [vmem:[%s834 + $0x48] sm:$0xff]
        %v845 = vld [vmem:[%s834 + $0x50] sm:$0xff]
        %v846 = vld [vmem:[%s834 + $0x58] sm:$0x3]
        %v847 = vld [vmem:[%s834 + $0x60] sm:$0xff]
        %v848 = vld [vmem:[%s834 + $0x68] sm:$0xff]
        %v849 = vld [vmem:[%s834 + $0x70] sm:$0x3]
        %v850 = vld [vmem:[%s834 + $0x78] sm:$0xff]
        %v851 = vld [vmem:[%s834 + $0x80] sm:$0xff]
        %v852 = vld [vmem:[%s834 + $0x88] sm:$0x3]
        %v853 = vld [vmem:[%s834 + $0x90] sm:$0xff]
        %v854 = vld [vmem:[%s834 + $0x98] sm:$0xff]
        %v855 = vld [vmem:[%s834 + $0xa0] sm:$0x3]
        %v856 = vld [vmem:[%s834 + $0xa8] sm:$0xff]
        %v857 = vld [vmem:[%s834 + $0xb0] sm:$0xff]
        %v858 = vld [vmem:[%s834 + $0xb8] sm:$0x3]
        %v859 = vld [vmem:[%s834 + $0xc0] sm:$0xff]
        %v860 = vld [vmem:[%s834 + $0xc8] sm:$0xff]
        %v861 = vld [vmem:[%s834 + $0xd0] sm:$0x3]
        %v862 = vld [vmem:[%s834 + $0xd8] sm:$0xff]
        %v863 = vld [vmem:[%s834 + $0xe0] sm:$0xff]
        %v864 = vld [vmem:[%s834 + $0xe8] sm:$0x3]
        %v865 = vld [vmem:[%s834 + $0xf0] sm:$0xff]
        %v866 = vld [vmem:[%s834 + $0xf8] sm:$0xff]
        %v867 = vld [vmem:[%s834 + $0x100] sm:$0x3]
        %v868 = vld [vmem:[%s834 + $0x108] sm:$0xff]
        %v869 = vld [vmem:[%s834 + $0x110] sm:$0xff]
        %v870 = vld [vmem:[%s834 + $0x118] sm:$0x3]
        %v871 = vld [vmem:[%s834 + $0x120] sm:$0xff]
        %v872 = vld [vmem:[%s834 + $0x128] sm:$0xff]
        %v873 = vld [vmem:[%s834 + $0x130] sm:$0x3]
        %v874 = vld [vmem:[%s834 + $0x138] sm:$0xff]
        %v875 = vld [vmem:[%s834 + $0x140] sm:$0xff]
        %v876 = vld [vmem:[%s834 + $0x148] sm:$0x3]
        %v877 = vld [vmem:[%s834 + $0x150] sm:$0xff]
        %v878 = vld [vmem:[%s834 + $0x158] sm:$0xff]
        %v879 = vld [vmem:[%s834 + $0x160] sm:$0x3]
        %v880 = vld [vmem:[%s834 + $0x168] sm:$0xff]
        %v881 = vld [vmem:[%s834 + $0x170] sm:$0xff]
        %v882 = vld [vmem:[%s834 + $0x178] sm:$0x3]
        %s883 = scalar_lea.vmem %s1, 4
        %v884 = vld [vmem:[%s883] sm:$0x1]
        %v885 = vlaneseq
        %v886 = vshrl.u32 %v885, 7
        %v887 = vsub.s32 0, %v886
        %v888 = vrot.slane %v884, %v887
        %v889 = vmul.f32 %v835, %v888
        %v890 = vmul.f32 %v836, %v888
        %v891 = vmul.f32 %v838, %v888
        %v892 = vmul.f32 %v839, %v888
        %v893 = vmul.f32 %v841, %v888
        %v894 = vmul.f32 %v842, %v888
        %v895 = vmul.f32 %v844, %v888
        %v896 = vmul.f32 %v845, %v888
        %v897 = vmul.f32 %v847, %v888
        %v898 = vmul.f32 %v848, %v888
        %v899 = vmul.f32 %v850, %v888
        %v900 = vmul.f32 %v851, %v888
        %v901 = vmul.f32 %v853, %v888
        %v902 = vmul.f32 %v854, %v888
        %v903 = vmul.f32 %v856, %v888
        %v904 = vmul.f32 %v857, %v888
        %v905 = vmul.f32 %v859, %v888
        %v906 = vmul.f32 %v860, %v888
        %v907 = vmul.f32 %v862, %v888
        %v908 = vmul.f32 %v863, %v888
        %v909 = vmul.f32 %v865, %v888
        %v910 = vmul.f32 %v866, %v888
        %v911 = vmul.f32 %v868, %v888
        %v912 = vmul.f32 %v869, %v888
        %v913 = vmul.f32 %v871, %v888
        %v914 = vmul.f32 %v872, %v888
        %v915 = vmul.f32 %v874, %v888
        %v916 = vmul.f32 %v875, %v888
        %v917 = vmul.f32 %v877, %v888
        %v918 = vmul.f32 %v878, %v888
        %v919 = vmul.f32 %v880, %v888
        %v920 = vmul.f32 %v881, %v888
        %v921 = vadd.f32 %v802, %v889
        %v922 = vadd.f32 %v803, %v890
        %v923 = vadd.f32 %v804, %v891
        %v924 = vadd.f32 %v805, %v892
        %v925 = vadd.f32 %v806, %v893
        %v926 = vadd.f32 %v807, %v894
        %v927 = vadd.f32 %v808, %v895
        %v928 = vadd.f32 %v809, %v896
        %v929 = vadd.f32 %v810, %v897
        %v930 = vadd.f32 %v811, %v898
        %v931 = vadd.f32 %v812, %v899
        %v932 = vadd.f32 %v813, %v900
        %v933 = vadd.f32 %v814, %v901
        %v934 = vadd.f32 %v815, %v902
        %v935 = vadd.f32 %v816, %v903
        %v936 = vadd.f32 %v817, %v904
        %v937 = vadd.f32 %v818, %v905
        %v938 = vadd.f32 %v819, %v906
        %v939 = vadd.f32 %v820, %v907
        %v940 = vadd.f32 %v821, %v908
        %v941 = vadd.f32 %v822, %v909
        %v942 = vadd.f32 %v823, %v910
        %v943 = vadd.f32 %v824, %v911
        %v944 = vadd.f32 %v825, %v912
        %v945 = vadd.f32 %v826, %v913
        %v946 = vadd.f32 %v827, %v914
        %v947 = vadd.f32 %v828, %v915
        %v948 = vadd.f32 %v829, %v916
        %v949 = vadd.f32 %v830, %v917
        %v950 = vadd.f32 %v831, %v918
        %v951 = vadd.f32 %v832, %v919
        %v952 = vadd.f32 %v833, %v920
        %v953 = vld [vmem:[%s883 + $0x1] sm:$0x1]
        %v954 = vlaneseq
        %v955 = vshrl.u32 %v954, 7
        %v956 = vsub.s32 0, %v955
        %v957 = vrot.slane %v953, %v956
        %v958 = vmul.f32 %v835, %v957
        %v959 = vmul.f32 %v836, %v957
        %v960 = vmul.f32 %v837, %v957
        %v961 = vmul.f32 %v838, %v957
        %v962 = vmul.f32 %v839, %v957
        %v963 = vmul.f32 %v840, %v957
        %v964 = vmul.f32 %v841, %v957
        %v965 = vmul.f32 %v842, %v957
        %v966 = vmul.f32 %v843, %v957
        %v967 = vmul.f32 %v844, %v957
        %v968 = vmul.f32 %v845, %v957
        %v969 = vmul.f32 %v846, %v957
        %v970 = vmul.f32 %v847, %v957
        %v971 = vmul.f32 %v848, %v957
        %v972 = vmul.f32 %v849, %v957
        %v973 = vmul.f32 %v850, %v957
        %v974 = vmul.f32 %v851, %v957
        %v975 = vmul.f32 %v852, %v957
        %v976 = vmul.f32 %v853, %v957
        %v977 = vmul.f32 %v854, %v957
        %v978 = vmul.f32 %v855, %v957
        %v979 = vmul.f32 %v856, %v957
        %v980 = vmul.f32 %v857, %v957
        %v981 = vmul.f32 %v858, %v957
        %v982 = vmul.f32 %v859, %v957
        %v983 = vmul.f32 %v860, %v957
        %v984 = vmul.f32 %v861, %v957
        %v985 = vmul.f32 %v862, %v957
        %v986 = vmul.f32 %v863, %v957
        %v987 = vmul.f32 %v864, %v957
        %v988 = vmul.f32 %v865, %v957
        %v989 = vmul.f32 %v866, %v957
        %v990 = vmul.f32 %v867, %v957
        %v991 = vmul.f32 %v868, %v957
        %v992 = vmul.f32 %v869, %v957
        %v993 = vmul.f32 %v870, %v957
        %v994 = vmul.f32 %v871, %v957
        %v995 = vmul.f32 %v872, %v957
        %v996 = vmul.f32 %v873, %v957
        %v997 = vmul.f32 %v874, %v957
        %v998 = vmul.f32 %v875, %v957
        %v999 = vmul.f32 %v876, %v957
        %v1000 = vmul.f32 %v877, %v957
        %v1001 = vmul.f32 %v878, %v957
        %v1002 = vmul.f32 %v879, %v957
        %v1003 = vmul.f32 %v880, %v957
        %v1004 = vmul.f32 %v881, %v957
        %v1005 = vmul.f32 %v882, %v957
        %v1054 = vrot.slane %v958, 1
        %v1055 = vrot.slane %v959, 1
        %v1056 = vsel %vm443, %v1054, %v1055
        %v1057 = vrot.slane %v960, 1
        %v1058 = vsel %vm443, %v1055, %v1057
        %v1059 = vrot.slane %v961, 1
        %v1060 = vrot.slane %v962, 1
        %v1061 = vsel %vm443, %v1059, %v1060
        %v1062 = vrot.slane %v963, 1
        %v1063 = vsel %vm443, %v1060, %v1062
        %v1064 = vrot.slane %v964, 1
        %v1065 = vrot.slane %v965, 1
        %v1066 = vsel %vm443, %v1064, %v1065
        %v1067 = vrot.slane %v966, 1
        %v1068 = vsel %vm443, %v1065, %v1067
        %v1069 = vrot.slane %v967, 1
        %v1070 = vrot.slane %v968, 1
        %v1071 = vsel %vm443, %v1069, %v1070
        %v1072 = vrot.slane %v969, 1
        %v1073 = vsel %vm443, %v1070, %v1072
        %v1074 = vrot.slane %v970, 1
        %v1075 = vrot.slane %v971, 1
        %v1076 = vsel %vm443, %v1074, %v1075
        %v1077 = vrot.slane %v972, 1
        %v1078 = vsel %vm443, %v1075, %v1077
        %v1079 = vrot.slane %v973, 1
        %v1080 = vrot.slane %v974, 1
        %v1081 = vsel %vm443, %v1079, %v1080
        %v1082 = vrot.slane %v975, 1
        %v1083 = vsel %vm443, %v1080, %v1082
        %v1084 = vrot.slane %v976, 1
        %v1085 = vrot.slane %v977, 1
        %v1086 = vsel %vm443, %v1084, %v1085
        %v1087 = vrot.slane %v978, 1
        %v1088 = vsel %vm443, %v1085, %v1087
        %v1089 = vrot.slane %v979, 1
        %v1090 = vrot.slane %v980, 1
        %v1091 = vsel %vm443, %v1089, %v1090
        %v1092 = vrot.slane %v981, 1
        %v1093 = vsel %vm443, %v1090, %v1092
        %v1094 = vrot.slane %v982, 1
        %v1095 = vrot.slane %v983, 1
        %v1096 = vsel %vm443, %v1094, %v1095
        %v1097 = vrot.slane %v984, 1
        %v1098 = vsel %vm443, %v1095, %v1097
        %v1099 = vrot.slane %v985, 1
        %v1100 = vrot.slane %v986, 1
        %v1101 = vsel %vm443, %v1099, %v1100
        %v1102 = vrot.slane %v987, 1
        %v1103 = vsel %vm443, %v1100, %v1102
        %v1104 = vrot.slane %v988, 1
        %v1105 = vrot.slane %v989, 1
        %v1106 = vsel %vm443, %v1104, %v1105
        %v1107 = vrot.slane %v990, 1
        %v1108 = vsel %vm443, %v1105, %v1107
        %v1109 = vrot.slane %v991, 1
        %v1110 = vrot.slane %v992, 1
        %v1111 = vsel %vm443, %v1109, %v1110
        %v1112 = vrot.slane %v993, 1
        %v1113 = vsel %vm443, %v1110, %v1112
        %v1114 = vrot.slane %v994, 1
        %v1115 = vrot.slane %v995, 1
        %v1116 = vsel %vm443, %v1114, %v1115
        %v1117 = vrot.slane %v996, 1
        %v1118 = vsel %vm443, %v1115, %v1117
        %v1119 = vrot.slane %v997, 1
        %v1120 = vrot.slane %v998, 1
        %v1121 = vsel %vm443, %v1119, %v1120
        %v1122 = vrot.slane %v999, 1
        %v1123 = vsel %vm443, %v1120, %v1122
        %v1124 = vrot.slane %v1000, 1
        %v1125 = vrot.slane %v1001, 1
        %v1126 = vsel %vm443, %v1124, %v1125
        %v1127 = vrot.slane %v1002, 1
        %v1128 = vsel %vm443, %v1125, %v1127
        %v1129 = vrot.slane %v1003, 1
        %v1130 = vrot.slane %v1004, 1
        %v1131 = vsel %vm443, %v1129, %v1130
        %v1132 = vrot.slane %v1005, 1
        %v1133 = vsel %vm443, %v1130, %v1132
        %v1166 = vadd.f32 %v921, %v1056
        %v1167 = vadd.f32 %v922, %v1058
        %v1168 = vadd.f32 %v923, %v1061
        %v1169 = vadd.f32 %v924, %v1063
        %v1170 = vadd.f32 %v925, %v1066
        %v1171 = vadd.f32 %v926, %v1068
        %v1172 = vadd.f32 %v927, %v1071
        %v1173 = vadd.f32 %v928, %v1073
        %v1174 = vadd.f32 %v929, %v1076
        %v1175 = vadd.f32 %v930, %v1078
        %v1176 = vadd.f32 %v931, %v1081
        %v1177 = vadd.f32 %v932, %v1083
        %v1178 = vadd.f32 %v933, %v1086
        %v1179 = vadd.f32 %v934, %v1088
        %v1180 = vadd.f32 %v935, %v1091
        %v1181 = vadd.f32 %v936, %v1093
        %v1182 = vadd.f32 %v937, %v1096
        %v1183 = vadd.f32 %v938, %v1098
        %v1184 = vadd.f32 %v939, %v1101
        %v1185 = vadd.f32 %v940, %v1103
        %v1186 = vadd.f32 %v941, %v1106
        %v1187 = vadd.f32 %v942, %v1108
        %v1188 = vadd.f32 %v943, %v1111
        %v1189 = vadd.f32 %v944, %v1113
        %v1190 = vadd.f32 %v945, %v1116
        %v1191 = vadd.f32 %v946, %v1118
        %v1192 = vadd.f32 %v947, %v1121
        %v1193 = vadd.f32 %v948, %v1123
        %v1194 = vadd.f32 %v949, %v1126
        %v1195 = vadd.f32 %v950, %v1128
        %v1196 = vadd.f32 %v951, %v1131
        %v1197 = vadd.f32 %v952, %v1133
        %v1198 = vld [vmem:[%s883 + $0x2] sm:$0x1]
        %v1199 = vlaneseq
        %v1200 = vshrl.u32 %v1199, 7
        %v1201 = vsub.s32 0, %v1200
        %v1202 = vrot.slane %v1198, %v1201
        %v1203 = vmul.f32 %v835, %v1202
        %v1204 = vmul.f32 %v836, %v1202
        %v1205 = vmul.f32 %v837, %v1202
        %v1206 = vmul.f32 %v838, %v1202
        %v1207 = vmul.f32 %v839, %v1202
        %v1208 = vmul.f32 %v840, %v1202
        %v1209 = vmul.f32 %v841, %v1202
        %v1210 = vmul.f32 %v842, %v1202
        %v1211 = vmul.f32 %v843, %v1202
        %v1212 = vmul.f32 %v844, %v1202
        %v1213 = vmul.f32 %v845, %v1202
        %v1214 = vmul.f32 %v846, %v1202
        %v1215 = vmul.f32 %v847, %v1202
        %v1216 = vmul.f32 %v848, %v1202
        %v1217 = vmul.f32 %v849, %v1202
        %v1218 = vmul.f32 %v850, %v1202
        %v1219 = vmul.f32 %v851, %v1202
        %v1220 = vmul.f32 %v852, %v1202
        %v1221 = vmul.f32 %v853, %v1202
        %v1222 = vmul.f32 %v854, %v1202
        %v1223 = vmul.f32 %v855, %v1202
        %v1224 = vmul.f32 %v856, %v1202
        %v1225 = vmul.f32 %v857, %v1202
        %v1226 = vmul.f32 %v858, %v1202
        %v1227 = vmul.f32 %v859, %v1202
        %v1228 = vmul.f32 %v860, %v1202
        %v1229 = vmul.f32 %v861, %v1202
        %v1230 = vmul.f32 %v862, %v1202
        %v1231 = vmul.f32 %v863, %v1202
        %v1232 = vmul.f32 %v864, %v1202
        %v1233 = vmul.f32 %v865, %v1202
        %v1234 = vmul.f32 %v866, %v1202
        %v1235 = vmul.f32 %v867, %v1202
        %v1236 = vmul.f32 %v868, %v1202
        %v1237 = vmul.f32 %v869, %v1202
        %v1238 = vmul.f32 %v870, %v1202
        %v1239 = vmul.f32 %v871, %v1202
        %v1240 = vmul.f32 %v872, %v1202
        %v1241 = vmul.f32 %v873, %v1202
        %v1242 = vmul.f32 %v874, %v1202
        %v1243 = vmul.f32 %v875, %v1202
        %v1244 = vmul.f32 %v876, %v1202
        %v1245 = vmul.f32 %v877, %v1202
        %v1246 = vmul.f32 %v878, %v1202
        %v1247 = vmul.f32 %v879, %v1202
        %v1248 = vmul.f32 %v880, %v1202
        %v1249 = vmul.f32 %v881, %v1202
        %v1250 = vmul.f32 %v882, %v1202
        %v1299 = vrot.slane %v1203, 2
        %v1300 = vrot.slane %v1204, 2
        %v1301 = vsel %vm689, %v1299, %v1300
        %v1302 = vrot.slane %v1205, 2
        %v1303 = vsel %vm689, %v1300, %v1302
        %v1304 = vrot.slane %v1206, 2
        %v1305 = vrot.slane %v1207, 2
        %v1306 = vsel %vm689, %v1304, %v1305
        %v1307 = vrot.slane %v1208, 2
        %v1308 = vsel %vm689, %v1305, %v1307
        %v1309 = vrot.slane %v1209, 2
        %v1310 = vrot.slane %v1210, 2
        %v1311 = vsel %vm689, %v1309, %v1310
        %v1312 = vrot.slane %v1211, 2
        %v1313 = vsel %vm689, %v1310, %v1312
        %v1314 = vrot.slane %v1212, 2
        %v1315 = vrot.slane %v1213, 2
        %v1316 = vsel %vm689, %v1314, %v1315
        %v1317 = vrot.slane %v1214, 2
        %v1318 = vsel %vm689, %v1315, %v1317
        %v1319 = vrot.slane %v1215, 2
        %v1320 = vrot.slane %v1216, 2
        %v1321 = vsel %vm689, %v1319, %v1320
        %v1322 = vrot.slane %v1217, 2
        %v1323 = vsel %vm689, %v1320, %v1322
        %v1324 = vrot.slane %v1218, 2
        %v1325 = vrot.slane %v1219, 2
        %v1326 = vsel %vm689, %v1324, %v1325
        %v1327 = vrot.slane %v1220, 2
        %v1328 = vsel %vm689, %v1325, %v1327
        %v1329 = vrot.slane %v1221, 2
        %v1330 = vrot.slane %v1222, 2
        %v1331 = vsel %vm689, %v1329, %v1330
        %v1332 = vrot.slane %v1223, 2
        %v1333 = vsel %vm689, %v1330, %v1332
        %v1334 = vrot.slane %v1224, 2
        %v1335 = vrot.slane %v1225, 2
        %v1336 = vsel %vm689, %v1334, %v1335
        %v1337 = vrot.slane %v1226, 2
        %v1338 = vsel %vm689, %v1335, %v1337
        %v1339 = vrot.slane %v1227, 2
        %v1340 = vrot.slane %v1228, 2
        %v1341 = vsel %vm689, %v1339, %v1340
        %v1342 = vrot.slane %v1229, 2
        %v1343 = vsel %vm689, %v1340, %v1342
        %v1344 = vrot.slane %v1230, 2
        %v1345 = vrot.slane %v1231, 2
        %v1346 = vsel %vm689, %v1344, %v1345
        %v1347 = vrot.slane %v1232, 2
        %v1348 = vsel %vm689, %v1345, %v1347
        %v1349 = vrot.slane %v1233, 2
        %v1350 = vrot.slane %v1234, 2
        %v1351 = vsel %vm689, %v1349, %v1350
        %v1352 = vrot.slane %v1235, 2
        %v1353 = vsel %vm689, %v1350, %v1352
        %v1354 = vrot.slane %v1236, 2
        %v1355 = vrot.slane %v1237, 2
        %v1356 = vsel %vm689, %v1354, %v1355
        %v1357 = vrot.slane %v1238, 2
        %v1358 = vsel %vm689, %v1355, %v1357
        %v1359 = vrot.slane %v1239, 2
        %v1360 = vrot.slane %v1240, 2
        %v1361 = vsel %vm689, %v1359, %v1360
        %v1362 = vrot.slane %v1241, 2
        %v1363 = vsel %vm689, %v1360, %v1362
        %v1364 = vrot.slane %v1242, 2
        %v1365 = vrot.slane %v1243, 2
        %v1366 = vsel %vm689, %v1364, %v1365
        %v1367 = vrot.slane %v1244, 2
        %v1368 = vsel %vm689, %v1365, %v1367
        %v1369 = vrot.slane %v1245, 2
        %v1370 = vrot.slane %v1246, 2
        %v1371 = vsel %vm689, %v1369, %v1370
        %v1372 = vrot.slane %v1247, 2
        %v1373 = vsel %vm689, %v1370, %v1372
        %v1374 = vrot.slane %v1248, 2
        %v1375 = vrot.slane %v1249, 2
        %v1376 = vsel %vm689, %v1374, %v1375
        %v1377 = vrot.slane %v1250, 2
        %v1378 = vsel %vm689, %v1375, %v1377
        %v1411 = vadd.f32 %v1166, %v1301
        %v1412 = vadd.f32 %v1167, %v1303
        %v1413 = vadd.f32 %v1168, %v1306
        %v1414 = vadd.f32 %v1169, %v1308
        %v1415 = vadd.f32 %v1170, %v1311
        %v1416 = vadd.f32 %v1171, %v1313
        %v1417 = vadd.f32 %v1172, %v1316
        %v1418 = vadd.f32 %v1173, %v1318
        %v1419 = vadd.f32 %v1174, %v1321
        %v1420 = vadd.f32 %v1175, %v1323
        %v1421 = vadd.f32 %v1176, %v1326
        %v1422 = vadd.f32 %v1177, %v1328
        %v1423 = vadd.f32 %v1178, %v1331
        %v1424 = vadd.f32 %v1179, %v1333
        %v1425 = vadd.f32 %v1180, %v1336
        %v1426 = vadd.f32 %v1181, %v1338
        %v1427 = vadd.f32 %v1182, %v1341
        %v1428 = vadd.f32 %v1183, %v1343
        %v1429 = vadd.f32 %v1184, %v1346
        %v1430 = vadd.f32 %v1185, %v1348
        %v1431 = vadd.f32 %v1186, %v1351
        %v1432 = vadd.f32 %v1187, %v1353
        %v1433 = vadd.f32 %v1188, %v1356
        %v1434 = vadd.f32 %v1189, %v1358
        %v1435 = vadd.f32 %v1190, %v1361
        %v1436 = vadd.f32 %v1191, %v1363
        %v1437 = vadd.f32 %v1192, %v1366
        %v1438 = vadd.f32 %v1193, %v1368
        %v1439 = vadd.f32 %v1194, %v1371
        %v1440 = vadd.f32 %v1195, %v1373
        %v1441 = vadd.f32 %v1196, %v1376
        %v1442 = vadd.f32 %v1197, %v1378
        %s1443 = scalar_lea.vmem %s254, 48
        %v1444 = vld [vmem:[%s1443] sm:$0xff]
        %v1445 = vld [vmem:[%s1443 + $0x8] sm:$0xff]
        %v1446 = vld [vmem:[%s1443 + $0x10] sm:$0x3]
        %v1447 = vld [vmem:[%s1443 + $0x18] sm:$0xff]
        %v1448 = vld [vmem:[%s1443 + $0x20] sm:$0xff]
        %v1449 = vld [vmem:[%s1443 + $0x28] sm:$0x3]
        %v1450 = vld [vmem:[%s1443 + $0x30] sm:$0xff]
        %v1451 = vld [vmem:[%s1443 + $0x38] sm:$0xff]
        %v1452 = vld [vmem:[%s1443 + $0x40] sm:$0x3]
        %v1453 = vld [vmem:[%s1443 + $0x48] sm:$0xff]
        %v1454 = vld [vmem:[%s1443 + $0x50] sm:$0xff]
        %v1455 = vld [vmem:[%s1443 + $0x58] sm:$0x3]
        %v1456 = vld [vmem:[%s1443 + $0x60] sm:$0xff]
        %v1457 = vld [vmem:[%s1443 + $0x68] sm:$0xff]
        %v1458 = vld [vmem:[%s1443 + $0x70] sm:$0x3]
        %v1459 = vld [vmem:[%s1443 + $0x78] sm:$0xff]
        %v1460 = vld [vmem:[%s1443 + $0x80] sm:$0xff]
        %v1461 = vld [vmem:[%s1443 + $0x88] sm:$0x3]
        %v1462 = vld [vmem:[%s1443 + $0x90] sm:$0xff]
        %v1463 = vld [vmem:[%s1443 + $0x98] sm:$0xff]
        %v1464 = vld [vmem:[%s1443 + $0xa0] sm:$0x3]
        %v1465 = vld [vmem:[%s1443 + $0xa8] sm:$0xff]
        %v1466 = vld [vmem:[%s1443 + $0xb0] sm:$0xff]
        %v1467 = vld [vmem:[%s1443 + $0xb8] sm:$0x3]
        %v1468 = vld [vmem:[%s1443 + $0xc0] sm:$0xff]
        %v1469 = vld [vmem:[%s1443 + $0xc8] sm:$0xff]
        %v1470 = vld [vmem:[%s1443 + $0xd0] sm:$0x3]
        %v1471 = vld [vmem:[%s1443 + $0xd8] sm:$0xff]
        %v1472 = vld [vmem:[%s1443 + $0xe0] sm:$0xff]
        %v1473 = vld [vmem:[%s1443 + $0xe8] sm:$0x3]
        %v1474 = vld [vmem:[%s1443 + $0xf0] sm:$0xff]
        %v1475 = vld [vmem:[%s1443 + $0xf8] sm:$0xff]
        %v1476 = vld [vmem:[%s1443 + $0x100] sm:$0x3]
        %v1477 = vld [vmem:[%s1443 + $0x108] sm:$0xff]
        %v1478 = vld [vmem:[%s1443 + $0x110] sm:$0xff]
        %v1479 = vld [vmem:[%s1443 + $0x118] sm:$0x3]
        %v1480 = vld [vmem:[%s1443 + $0x120] sm:$0xff]
        %v1481 = vld [vmem:[%s1443 + $0x128] sm:$0xff]
        %v1482 = vld [vmem:[%s1443 + $0x130] sm:$0x3]
        %v1483 = vld [vmem:[%s1443 + $0x138] sm:$0xff]
        %v1484 = vld [vmem:[%s1443 + $0x140] sm:$0xff]
        %v1485 = vld [vmem:[%s1443 + $0x148] sm:$0x3]
        %v1486 = vld [vmem:[%s1443 + $0x150] sm:$0xff]
        %v1487 = vld [vmem:[%s1443 + $0x158] sm:$0xff]
        %v1488 = vld [vmem:[%s1443 + $0x160] sm:$0x3]
        %v1489 = vld [vmem:[%s1443 + $0x168] sm:$0xff]
        %v1490 = vld [vmem:[%s1443 + $0x170] sm:$0xff]
        %v1491 = vld [vmem:[%s1443 + $0x178] sm:$0x3]
        %s1492 = scalar_lea.vmem %s1, 8
        %v1493 = vld [vmem:[%s1492] sm:$0x1]
        %v1494 = vlaneseq
        %v1495 = vshrl.u32 %v1494, 7
        %v1496 = vsub.s32 0, %v1495
        %v1497 = vrot.slane %v1493, %v1496
        %v1498 = vmul.f32 %v1444, %v1497
        %v1499 = vmul.f32 %v1445, %v1497
        %v1500 = vmul.f32 %v1447, %v1497
        %v1501 = vmul.f32 %v1448, %v1497
        %v1502 = vmul.f32 %v1450, %v1497
        %v1503 = vmul.f32 %v1451, %v1497
        %v1504 = vmul.f32 %v1453, %v1497
        %v1505 = vmul.f32 %v1454, %v1497
        %v1506 = vmul.f32 %v1456, %v1497
        %v1507 = vmul.f32 %v1457, %v1497
        %v1508 = vmul.f32 %v1459, %v1497
        %v1509 = vmul.f32 %v1460, %v1497
        %v1510 = vmul.f32 %v1462, %v1497
        %v1511 = vmul.f32 %v1463, %v1497
        %v1512 = vmul.f32 %v1465, %v1497
        %v1513 = vmul.f32 %v1466, %v1497
        %v1514 = vmul.f32 %v1468, %v1497
        %v1515 = vmul.f32 %v1469, %v1497
        %v1516 = vmul.f32 %v1471, %v1497
        %v1517 = vmul.f32 %v1472, %v1497
        %v1518 = vmul.f32 %v1474, %v1497
        %v1519 = vmul.f32 %v1475, %v1497
        %v1520 = vmul.f32 %v1477, %v1497
        %v1521 = vmul.f32 %v1478, %v1497
        %v1522 = vmul.f32 %v1480, %v1497
        %v1523 = vmul.f32 %v1481, %v1497
        %v1524 = vmul.f32 %v1483, %v1497
        %v1525 = vmul.f32 %v1484, %v1497
        %v1526 = vmul.f32 %v1486, %v1497
        %v1527 = vmul.f32 %v1487, %v1497
        %v1528 = vmul.f32 %v1489, %v1497
        %v1529 = vmul.f32 %v1490, %v1497
        %v1530 = vadd.f32 %v1411, %v1498
        %v1531 = vadd.f32 %v1412, %v1499
        %v1532 = vadd.f32 %v1413, %v1500
        %v1533 = vadd.f32 %v1414, %v1501
        %v1534 = vadd.f32 %v1415, %v1502
        %v1535 = vadd.f32 %v1416, %v1503
        %v1536 = vadd.f32 %v1417, %v1504
        %v1537 = vadd.f32 %v1418, %v1505
        %v1538 = vadd.f32 %v1419, %v1506
        %v1539 = vadd.f32 %v1420, %v1507
        %v1540 = vadd.f32 %v1421, %v1508
        %v1541 = vadd.f32 %v1422, %v1509
        %v1542 = vadd.f32 %v1423, %v1510
        %v1543 = vadd.f32 %v1424, %v1511
        %v1544 = vadd.f32 %v1425, %v1512
        %v1545 = vadd.f32 %v1426, %v1513
        %v1546 = vadd.f32 %v1427, %v1514
        %v1547 = vadd.f32 %v1428, %v1515
        %v1548 = vadd.f32 %v1429, %v1516
        %v1549 = vadd.f32 %v1430, %v1517
        %v1550 = vadd.f32 %v1431, %v1518
        %v1551 = vadd.f32 %v1432, %v1519
        %v1552 = vadd.f32 %v1433, %v1520
        %v1553 = vadd.f32 %v1434, %v1521
        %v1554 = vadd.f32 %v1435, %v1522
        %v1555 = vadd.f32 %v1436, %v1523
        %v1556 = vadd.f32 %v1437, %v1524
        %v1557 = vadd.f32 %v1438, %v1525
        %v1558 = vadd.f32 %v1439, %v1526
        %v1559 = vadd.f32 %v1440, %v1527
        %v1560 = vadd.f32 %v1441, %v1528
        %v1561 = vadd.f32 %v1442, %v1529
        %v1562 = vld [vmem:[%s1492 + $0x1] sm:$0x1]
        %v1563 = vlaneseq
        %v1564 = vshrl.u32 %v1563, 7
        %v1565 = vsub.s32 0, %v1564
        %v1566 = vrot.slane %v1562, %v1565
        %v1567 = vmul.f32 %v1444, %v1566
        %v1568 = vmul.f32 %v1445, %v1566
        %v1569 = vmul.f32 %v1446, %v1566
        %v1570 = vmul.f32 %v1447, %v1566
        %v1571 = vmul.f32 %v1448, %v1566
        %v1572 = vmul.f32 %v1449, %v1566
        %v1573 = vmul.f32 %v1450, %v1566
        %v1574 = vmul.f32 %v1451, %v1566
        %v1575 = vmul.f32 %v1452, %v1566
        %v1576 = vmul.f32 %v1453, %v1566
        %v1577 = vmul.f32 %v1454, %v1566
        %v1578 = vmul.f32 %v1455, %v1566
        %v1579 = vmul.f32 %v1456, %v1566
        %v1580 = vmul.f32 %v1457, %v1566
        %v1581 = vmul.f32 %v1458, %v1566
        %v1582 = vmul.f32 %v1459, %v1566
        %v1583 = vmul.f32 %v1460, %v1566
        %v1584 = vmul.f32 %v1461, %v1566
        %v1585 = vmul.f32 %v1462, %v1566
        %v1586 = vmul.f32 %v1463, %v1566
        %v1587 = vmul.f32 %v1464, %v1566
        %v1588 = vmul.f32 %v1465, %v1566
        %v1589 = vmul.f32 %v1466, %v1566
        %v1590 = vmul.f32 %v1467, %v1566
        %v1591 = vmul.f32 %v1468, %v1566
        %v1592 = vmul.f32 %v1469, %v1566
        %v1593 = vmul.f32 %v1470, %v1566
        %v1594 = vmul.f32 %v1471, %v1566
        %v1595 = vmul.f32 %v1472, %v1566
        %v1596 = vmul.f32 %v1473, %v1566
        %v1597 = vmul.f32 %v1474, %v1566
        %v1598 = vmul.f32 %v1475, %v1566
        %v1599 = vmul.f32 %v1476, %v1566
        %v1600 = vmul.f32 %v1477, %v1566
        %v1601 = vmul.f32 %v1478, %v1566
        %v1602 = vmul.f32 %v1479, %v1566
        %v1603 = vmul.f32 %v1480, %v1566
        %v1604 = vmul.f32 %v1481, %v1566
        %v1605 = vmul.f32 %v1482, %v1566
        %v1606 = vmul.f32 %v1483, %v1566
        %v1607 = vmul.f32 %v1484, %v1566
        %v1608 = vmul.f32 %v1485, %v1566
        %v1609 = vmul.f32 %v1486, %v1566
        %v1610 = vmul.f32 %v1487, %v1566
        %v1611 = vmul.f32 %v1488, %v1566
        %v1612 = vmul.f32 %v1489, %v1566
        %v1613 = vmul.f32 %v1490, %v1566
        %v1614 = vmul.f32 %v1491, %v1566
        %v1663 = vrot.slane %v1567, 1
        %v1664 = vrot.slane %v1568, 1
        %v1665 = vsel %vm443, %v1663, %v1664
        %v1666 = vrot.slane %v1569, 1
        %v1667 = vsel %vm443, %v1664, %v1666
        %v1668 = vrot.slane %v1570, 1
        %v1669 = vrot.slane %v1571, 1
        %v1670 = vsel %vm443, %v1668, %v1669
        %v1671 = vrot.slane %v1572, 1
        %v1672 = vsel %vm443, %v1669, %v1671
        %v1673 = vrot.slane %v1573, 1
        %v1674 = vrot.slane %v1574, 1
        %v1675 = vsel %vm443, %v1673, %v1674
        %v1676 = vrot.slane %v1575, 1
        %v1677 = vsel %vm443, %v1674, %v1676
        %v1678 = vrot.slane %v1576, 1
        %v1679 = vrot.slane %v1577, 1
        %v1680 = vsel %vm443, %v1678, %v1679
        %v1681 = vrot.slane %v1578, 1
        %v1682 = vsel %vm443, %v1679, %v1681
        %v1683 = vrot.slane %v1579, 1
        %v1684 = vrot.slane %v1580, 1
        %v1685 = vsel %vm443, %v1683, %v1684
        %v1686 = vrot.slane %v1581, 1
        %v1687 = vsel %vm443, %v1684, %v1686
        %v1688 = vrot.slane %v1582, 1
        %v1689 = vrot.slane %v1583, 1
        %v1690 = vsel %vm443, %v1688, %v1689
        %v1691 = vrot.slane %v1584, 1
        %v1692 = vsel %vm443, %v1689, %v1691
        %v1693 = vrot.slane %v1585, 1
        %v1694 = vrot.slane %v1586, 1
        %v1695 = vsel %vm443, %v1693, %v1694
        %v1696 = vrot.slane %v1587, 1
        %v1697 = vsel %vm443, %v1694, %v1696
        %v1698 = vrot.slane %v1588, 1
        %v1699 = vrot.slane %v1589, 1
        %v1700 = vsel %vm443, %v1698, %v1699
        %v1701 = vrot.slane %v1590, 1
        %v1702 = vsel %vm443, %v1699, %v1701
        %v1703 = vrot.slane %v1591, 1
        %v1704 = vrot.slane %v1592, 1
        %v1705 = vsel %vm443, %v1703, %v1704
        %v1706 = vrot.slane %v1593, 1
        %v1707 = vsel %vm443, %v1704, %v1706
        %v1708 = vrot.slane %v1594, 1
        %v1709 = vrot.slane %v1595, 1
        %v1710 = vsel %vm443, %v1708, %v1709
        %v1711 = vrot.slane %v1596, 1
        %v1712 = vsel %vm443, %v1709, %v1711
        %v1713 = vrot.slane %v1597, 1
        %v1714 = vrot.slane %v1598, 1
        %v1715 = vsel %vm443, %v1713, %v1714
        %v1716 = vrot.slane %v1599, 1
        %v1717 = vsel %vm443, %v1714, %v1716
        %v1718 = vrot.slane %v1600, 1
        %v1719 = vrot.slane %v1601, 1
        %v1720 = vsel %vm443, %v1718, %v1719
        %v1721 = vrot.slane %v1602, 1
        %v1722 = vsel %vm443, %v1719, %v1721
        %v1723 = vrot.slane %v1603, 1
        %v1724 = vrot.slane %v1604, 1
        %v1725 = vsel %vm443, %v1723, %v1724
        %v1726 = vrot.slane %v1605, 1
        %v1727 = vsel %vm443, %v1724, %v1726
        %v1728 = vrot.slane %v1606, 1
        %v1729 = vrot.slane %v1607, 1
        %v1730 = vsel %vm443, %v1728, %v1729
        %v1731 = vrot.slane %v1608, 1
        %v1732 = vsel %vm443, %v1729, %v1731
        %v1733 = vrot.slane %v1609, 1
        %v1734 = vrot.slane %v1610, 1
        %v1735 = vsel %vm443, %v1733, %v1734
        %v1736 = vrot.slane %v1611, 1
        %v1737 = vsel %vm443, %v1734, %v1736
        %v1738 = vrot.slane %v1612, 1
        %v1739 = vrot.slane %v1613, 1
        %v1740 = vsel %vm443, %v1738, %v1739
        %v1741 = vrot.slane %v1614, 1
        %v1742 = vsel %vm443, %v1739, %v1741
        %v1775 = vadd.f32 %v1530, %v1665
        %v1776 = vadd.f32 %v1531, %v1667
        %v1777 = vadd.f32 %v1532, %v1670
        %v1778 = vadd.f32 %v1533, %v1672
        %v1779 = vadd.f32 %v1534, %v1675
        %v1780 = vadd.f32 %v1535, %v1677
        %v1781 = vadd.f32 %v1536, %v1680
        %v1782 = vadd.f32 %v1537, %v1682
        %v1783 = vadd.f32 %v1538, %v1685
        %v1784 = vadd.f32 %v1539, %v1687
        %v1785 = vadd.f32 %v1540, %v1690
        %v1786 = vadd.f32 %v1541, %v1692
        %v1787 = vadd.f32 %v1542, %v1695
        %v1788 = vadd.f32 %v1543, %v1697
        %v1789 = vadd.f32 %v1544, %v1700
        %v1790 = vadd.f32 %v1545, %v1702
        %v1791 = vadd.f32 %v1546, %v1705
        %v1792 = vadd.f32 %v1547, %v1707
        %v1793 = vadd.f32 %v1548, %v1710
        %v1794 = vadd.f32 %v1549, %v1712
        %v1795 = vadd.f32 %v1550, %v1715
        %v1796 = vadd.f32 %v1551, %v1717
        %v1797 = vadd.f32 %v1552, %v1720
        %v1798 = vadd.f32 %v1553, %v1722
        %v1799 = vadd.f32 %v1554, %v1725
        %v1800 = vadd.f32 %v1555, %v1727
        %v1801 = vadd.f32 %v1556, %v1730
        %v1802 = vadd.f32 %v1557, %v1732
        %v1803 = vadd.f32 %v1558, %v1735
        %v1804 = vadd.f32 %v1559, %v1737
        %v1805 = vadd.f32 %v1560, %v1740
        %v1806 = vadd.f32 %v1561, %v1742
        %v1807 = vld [vmem:[%s1492 + $0x2] sm:$0x1]
        %v1808 = vlaneseq
        %v1809 = vshrl.u32 %v1808, 7
        %v1810 = vsub.s32 0, %v1809
        %v1811 = vrot.slane %v1807, %v1810
        %v1812 = vmul.f32 %v1444, %v1811
        %v1813 = vmul.f32 %v1445, %v1811
        %v1814 = vmul.f32 %v1446, %v1811
        %v1815 = vmul.f32 %v1447, %v1811
        %v1816 = vmul.f32 %v1448, %v1811
        %v1817 = vmul.f32 %v1449, %v1811
        %v1818 = vmul.f32 %v1450, %v1811
        %v1819 = vmul.f32 %v1451, %v1811
        %v1820 = vmul.f32 %v1452, %v1811
        %v1821 = vmul.f32 %v1453, %v1811
        %v1822 = vmul.f32 %v1454, %v1811
        %v1823 = vmul.f32 %v1455, %v1811
        %v1824 = vmul.f32 %v1456, %v1811
        %v1825 = vmul.f32 %v1457, %v1811
        %v1826 = vmul.f32 %v1458, %v1811
        %v1827 = vmul.f32 %v1459, %v1811
        %v1828 = vmul.f32 %v1460, %v1811
        %v1829 = vmul.f32 %v1461, %v1811
        %v1830 = vmul.f32 %v1462, %v1811
        %v1831 = vmul.f32 %v1463, %v1811
        %v1832 = vmul.f32 %v1464, %v1811
        %v1833 = vmul.f32 %v1465, %v1811
        %v1834 = vmul.f32 %v1466, %v1811
        %v1835 = vmul.f32 %v1467, %v1811
        %v1836 = vmul.f32 %v1468, %v1811
        %v1837 = vmul.f32 %v1469, %v1811
        %v1838 = vmul.f32 %v1470, %v1811
        %v1839 = vmul.f32 %v1471, %v1811
        %v1840 = vmul.f32 %v1472, %v1811
        %v1841 = vmul.f32 %v1473, %v1811
        %v1842 = vmul.f32 %v1474, %v1811
        %v1843 = vmul.f32 %v1475, %v1811
        %v1844 = vmul.f32 %v1476, %v1811
        %v1845 = vmul.f32 %v1477, %v1811
        %v1846 = vmul.f32 %v1478, %v1811
        %v1847 = vmul.f32 %v1479, %v1811
        %v1848 = vmul.f32 %v1480, %v1811
        %v1849 = vmul.f32 %v1481, %v1811
        %v1850 = vmul.f32 %v1482, %v1811
        %v1851 = vmul.f32 %v1483, %v1811
        %v1852 = vmul.f32 %v1484, %v1811
        %v1853 = vmul.f32 %v1485, %v1811
        %v1854 = vmul.f32 %v1486, %v1811
        %v1855 = vmul.f32 %v1487, %v1811
        %v1856 = vmul.f32 %v1488, %v1811
        %v1857 = vmul.f32 %v1489, %v1811
        %v1858 = vmul.f32 %v1490, %v1811
        %v1859 = vmul.f32 %v1491, %v1811
        %v1908 = vrot.slane %v1812, 2
        %v1909 = vrot.slane %v1813, 2
        %v1910 = vsel %vm689, %v1908, %v1909
        %v1911 = vrot.slane %v1814, 2
        %v1912 = vsel %vm689, %v1909, %v1911
        %v1913 = vrot.slane %v1815, 2
        %v1914 = vrot.slane %v1816, 2
        %v1915 = vsel %vm689, %v1913, %v1914
        %v1916 = vrot.slane %v1817, 2
        %v1917 = vsel %vm689, %v1914, %v1916
        %v1918 = vrot.slane %v1818, 2
        %v1919 = vrot.slane %v1819, 2
        %v1920 = vsel %vm689, %v1918, %v1919
        %v1921 = vrot.slane %v1820, 2
        %v1922 = vsel %vm689, %v1919, %v1921
        %v1923 = vrot.slane %v1821, 2
        %v1924 = vrot.slane %v1822, 2
        %v1925 = vsel %vm689, %v1923, %v1924
        %v1926 = vrot.slane %v1823, 2
        %v1927 = vsel %vm689, %v1924, %v1926
        %v1928 = vrot.slane %v1824, 2
        %v1929 = vrot.slane %v1825, 2
        %v1930 = vsel %vm689, %v1928, %v1929
        %v1931 = vrot.slane %v1826, 2
        %v1932 = vsel %vm689, %v1929, %v1931
        %v1933 = vrot.slane %v1827, 2
        %v1934 = vrot.slane %v1828, 2
        %v1935 = vsel %vm689, %v1933, %v1934
        %v1936 = vrot.slane %v1829, 2
        %v1937 = vsel %vm689, %v1934, %v1936
        %v1938 = vrot.slane %v1830, 2
        %v1939 = vrot.slane %v1831, 2
        %v1940 = vsel %vm689, %v1938, %v1939
        %v1941 = vrot.slane %v1832, 2
        %v1942 = vsel %vm689, %v1939, %v1941
        %v1943 = vrot.slane %v1833, 2
        %v1944 = vrot.slane %v1834, 2
        %v1945 = vsel %vm689, %v1943, %v1944
        %v1946 = vrot.slane %v1835, 2
        %v1947 = vsel %vm689, %v1944, %v1946
        %v1948 = vrot.slane %v1836, 2
        %v1949 = vrot.slane %v1837, 2
        %v1950 = vsel %vm689, %v1948, %v1949
        %v1951 = vrot.slane %v1838, 2
        %v1952 = vsel %vm689, %v1949, %v1951
        %v1953 = vrot.slane %v1839, 2
        %v1954 = vrot.slane %v1840, 2
        %v1955 = vsel %vm689, %v1953, %v1954
        %v1956 = vrot.slane %v1841, 2
        %v1957 = vsel %vm689, %v1954, %v1956
        %v1958 = vrot.slane %v1842, 2
        %v1959 = vrot.slane %v1843, 2
        %v1960 = vsel %vm689, %v1958, %v1959
        %v1961 = vrot.slane %v1844, 2
        %v1962 = vsel %vm689, %v1959, %v1961
        %v1963 = vrot.slane %v1845, 2
        %v1964 = vrot.slane %v1846, 2
        %v1965 = vsel %vm689, %v1963, %v1964
        %v1966 = vrot.slane %v1847, 2
        %v1967 = vsel %vm689, %v1964, %v1966
        %v1968 = vrot.slane %v1848, 2
        %v1969 = vrot.slane %v1849, 2
        %v1970 = vsel %vm689, %v1968, %v1969
        %v1971 = vrot.slane %v1850, 2
        %v1972 = vsel %vm689, %v1969, %v1971
        %v1973 = vrot.slane %v1851, 2
        %v1974 = vrot.slane %v1852, 2
        %v1975 = vsel %vm689, %v1973, %v1974
        %v1976 = vrot.slane %v1853, 2
        %v1977 = vsel %vm689, %v1974, %v1976
        %v1978 = vrot.slane %v1854, 2
        %v1979 = vrot.slane %v1855, 2
        %v1980 = vsel %vm689, %v1978, %v1979
        %v1981 = vrot.slane %v1856, 2
        %v1982 = vsel %vm689, %v1979, %v1981
        %v1983 = vrot.slane %v1857, 2
        %v1984 = vrot.slane %v1858, 2
        %v1985 = vsel %vm689, %v1983, %v1984
        %v1986 = vrot.slane %v1859, 2
        %v1987 = vsel %vm689, %v1984, %v1986
        %v2020 = vadd.f32 %v1775, %v1910
        %v2021 = vadd.f32 %v1776, %v1912
        %v2022 = vadd.f32 %v1777, %v1915
        %v2023 = vadd.f32 %v1778, %v1917
        %v2024 = vadd.f32 %v1779, %v1920
        %v2025 = vadd.f32 %v1780, %v1922
        %v2026 = vadd.f32 %v1781, %v1925
        %v2027 = vadd.f32 %v1782, %v1927
        %v2028 = vadd.f32 %v1783, %v1930
        %v2029 = vadd.f32 %v1784, %v1932
        %v2030 = vadd.f32 %v1785, %v1935
        %v2031 = vadd.f32 %v1786, %v1937
        %v2032 = vadd.f32 %v1787, %v1940
        %v2033 = vadd.f32 %v1788, %v1942
        %v2034 = vadd.f32 %v1789, %v1945
        %v2035 = vadd.f32 %v1790, %v1947
        %v2036 = vadd.f32 %v1791, %v1950
        %v2037 = vadd.f32 %v1792, %v1952
        %v2038 = vadd.f32 %v1793, %v1955
        %v2039 = vadd.f32 %v1794, %v1957
        %v2040 = vadd.f32 %v1795, %v1960
        %v2041 = vadd.f32 %v1796, %v1962
        %v2042 = vadd.f32 %v1797, %v1965
        %v2043 = vadd.f32 %v1798, %v1967
        %v2044 = vadd.f32 %v1799, %v1970
        %v2045 = vadd.f32 %v1800, %v1972
        %v2046 = vadd.f32 %v1801, %v1975
        %v2047 = vadd.f32 %v1802, %v1977
        %v2048 = vadd.f32 %v1803, %v1980
        %v2049 = vadd.f32 %v1804, %v1982
        %v2050 = vadd.f32 %v1805, %v1985
        %v2051 = vadd.f32 %v1806, %v1987
        %v2052 = vld [vmem:[%s3] sm:$0x1]
        %v2054 = vlaneseq
        %v2055 = vshrl.u32 %v2054, 7
        %v2056 = vsub.s32 0, %v2055
        %v2057 = vrot.slane %v2052, %v2056
        %v2059 = vadd.f32 %v2020, %v2057
        %v2060 = vadd.f32 %v2021, %v2057
        %v2061 = vadd.f32 %v2022, %v2057
        %v2062 = vadd.f32 %v2023, %v2057
        %v2063 = vadd.f32 %v2024, %v2057
        %v2064 = vadd.f32 %v2025, %v2057
        %v2065 = vadd.f32 %v2026, %v2057
        %v2066 = vadd.f32 %v2027, %v2057
        %v2067 = vadd.f32 %v2028, %v2057
        %v2068 = vadd.f32 %v2029, %v2057
        %v2069 = vadd.f32 %v2030, %v2057
        %v2070 = vadd.f32 %v2031, %v2057
        %v2071 = vadd.f32 %v2032, %v2057
        %v2072 = vadd.f32 %v2033, %v2057
        %v2073 = vadd.f32 %v2034, %v2057
        %v2074 = vadd.f32 %v2035, %v2057
        %v2075 = vadd.f32 %v2036, %v2057
        %v2076 = vadd.f32 %v2037, %v2057
        %v2077 = vadd.f32 %v2038, %v2057
        %v2078 = vadd.f32 %v2039, %v2057
        %v2079 = vadd.f32 %v2040, %v2057
        %v2080 = vadd.f32 %v2041, %v2057
        %v2081 = vadd.f32 %v2042, %v2057
        %v2082 = vadd.f32 %v2043, %v2057
        %v2083 = vadd.f32 %v2044, %v2057
        %v2084 = vadd.f32 %v2045, %v2057
        %v2085 = vadd.f32 %v2046, %v2057
        %v2086 = vadd.f32 %v2047, %v2057
        %v2087 = vadd.f32 %v2048, %v2057
        %v2088 = vadd.f32 %v2049, %v2057
        %v2089 = vadd.f32 %v2050, %v2057
        %v2090 = vadd.f32 %v2051, %v2057
        %v2091 = vmax.f32 %v2059, 0.0
        %v2092 = vmax.f32 %v2060, 0.0
        %v2093 = vmax.f32 %v2061, 0.0
        %v2094 = vmax.f32 %v2062, 0.0
        %v2095 = vmax.f32 %v2063, 0.0
        %v2096 = vmax.f32 %v2064, 0.0
        %v2097 = vmax.f32 %v2065, 0.0
        %v2098 = vmax.f32 %v2066, 0.0
        %v2099 = vmax.f32 %v2067, 0.0
        %v2100 = vmax.f32 %v2068, 0.0
        %v2101 = vmax.f32 %v2069, 0.0
        %v2102 = vmax.f32 %v2070, 0.0
        %v2103 = vmax.f32 %v2071, 0.0
        %v2104 = vmax.f32 %v2072, 0.0
        %v2105 = vmax.f32 %v2073, 0.0
        %v2106 = vmax.f32 %v2074, 0.0
        %v2107 = vmax.f32 %v2075, 0.0
        %v2108 = vmax.f32 %v2076, 0.0
        %v2109 = vmax.f32 %v2077, 0.0
        %v2110 = vmax.f32 %v2078, 0.0
        %v2111 = vmax.f32 %v2079, 0.0
        %v2112 = vmax.f32 %v2080, 0.0
        %v2113 = vmax.f32 %v2081, 0.0
        %v2114 = vmax.f32 %v2082, 0.0
        %v2115 = vmax.f32 %v2083, 0.0
        %v2116 = vmax.f32 %v2084, 0.0
        %v2117 = vmax.f32 %v2085, 0.0
        %v2118 = vmax.f32 %v2086, 0.0
        %v2119 = vmax.f32 %v2087, 0.0
        %v2120 = vmax.f32 %v2088, 0.0
        %v2121 = vmax.f32 %v2089, 0.0
        %v2122 = vmax.f32 %v2090, 0.0
        %v2123 = vld [vmem:[%s2] sm:$0xff]
        %v2124 = vld [vmem:[%s2 + $0x8] sm:$0xff]
        %v2125 = vld [vmem:[%s2 + $0x10] sm:$0xff]
        %v2126 = vld [vmem:[%s2 + $0x18] sm:$0xff]
        %v2127 = vld [vmem:[%s2 + $0x20] sm:$0xff]
        %v2128 = vld [vmem:[%s2 + $0x28] sm:$0xff]
        %v2129 = vld [vmem:[%s2 + $0x30] sm:$0xff]
        %v2130 = vld [vmem:[%s2 + $0x38] sm:$0xff]
        %v2131 = vld [vmem:[%s2 + $0x40] sm:$0xff]
        %v2132 = vld [vmem:[%s2 + $0x48] sm:$0xff]
        %v2133 = vld [vmem:[%s2 + $0x50] sm:$0xff]
        %v2134 = vld [vmem:[%s2 + $0x58] sm:$0xff]
        %v2135 = vld [vmem:[%s2 + $0x60] sm:$0xff]
        %v2136 = vld [vmem:[%s2 + $0x68] sm:$0xff]
        %v2137 = vld [vmem:[%s2 + $0x70] sm:$0xff]
        %v2138 = vld [vmem:[%s2 + $0x78] sm:$0xff]
        %v2139 = vld [vmem:[%s4] sm:$0x1]
        %v2141 = vlaneseq
        %v2142 = vshrl.u32 %v2141, 7
        %v2143 = vsub.s32 0, %v2142
        %v2144 = vrot.slane %v2139, %v2143
        %2146 = vmatprep.subr.mxu0 0.0
        %2147 = vmatpush1.msra.mxu0 %v2123
        %2148 = vmatprep.subr.mxu0 0.0
        %2149 = vmatpush1.msra.mxu0 %v2124
        %2150 = vmatprep.subr.mxu0 0.0
        %2151 = vmatpush1.msra.mxu0 %v2125
        %2152 = vmatprep.subr.mxu0 0.0
        %2153 = vmatpush1.msra.mxu0 %v2126
        %2154 = vmatprep.subr.mxu0 0.0
        %2155 = vmatpush1.msra.mxu0 %v2127
        %2156 = vmatprep.subr.mxu0 0.0
        %2157 = vmatpush1.msra.mxu0 %v2128
        %2158 = vmatprep.subr.mxu0 0.0
        %2159 = vmatpush1.msra.mxu0 %v2129
        %2160 = vmatprep.subr.mxu0 0.0
        %2161 = vmatpush1.msra.mxu0 %v2130
        %2162 = vmatprep.subr.mxu0 0.0
        %2163 = vmatpush1.msra.mxu0 %v2131
        %2164 = vmatprep.subr.mxu0 0.0
        %2165 = vmatpush1.msra.mxu0 %v2132
        %2166 = vmatprep.subr.mxu0 0.0
        %2167 = vmatpush1.msra.mxu0 %v2133
        %2168 = vmatprep.subr.mxu0 0.0
        %2169 = vmatpush1.msra.mxu0 %v2134
        %2170 = vmatprep.subr.mxu0 0.0
        %2171 = vmatpush1.msra.mxu0 %v2135
        %2172 = vmatprep.subr.mxu0 0.0
        %2173 = vmatpush1.msra.mxu0 %v2136
        %2174 = vmatprep.subr.mxu0 0.0
        %2175 = vmatpush1.msra.mxu0 %v2137
        %2176 = vmatprep.subr.mxu0 0.0
        %2177 = vmatpush1.msra.mxu0 %v2138
        %2178 = vmatprep.subr.mxu0 0.0
        %2179 = vmatpush1.msra.mxu0 0.0
        %2180 = vmatprep.subr.mxu0 0.0
        %2181 = vmatpush1.msra.mxu0 0.0
        %2182 = vmatprep.subr.mxu0 0.0
        %2183 = vmatpush1.msra.mxu0 0.0
        %2184 = vmatprep.subr.mxu0 0.0
        %2185 = vmatpush1.msra.mxu0 0.0
        %2186 = vmatprep.subr.mxu0 0.0
        %2187 = vmatpush1.msra.mxu0 0.0
        %2188 = vmatprep.subr.mxu0 0.0
        %2189 = vmatpush1.msra.mxu0 0.0
        %2190 = vmatprep.subr.mxu0 0.0
        %2191 = vmatpush1.msra.mxu0 0.0
        %2192 = vmatprep.subr.mxu0 0.0
        %2193 = vmatpush1.msra.mxu0 0.0
        %2194 = vmatprep.subr.mxu0 0.0
        %2195 = vmatpush1.msra.mxu0 0.0
        %2196 = vmatprep.subr.mxu0 0.0
        %2197 = vmatpush1.msra.mxu0 0.0
        %2198 = vmatprep.subr.mxu0 0.0
        %2199 = vmatpush1.msra.mxu0 0.0
        %2200 = vmatprep.subr.mxu0 0.0
        %2201 = vmatpush1.msra.mxu0 0.0
        %2202 = vmatprep.subr.mxu0 0.0
        %2203 = vmatpush1.msra.mxu0 0.0
        %2204 = vmatprep.subr.mxu0 0.0
        %2205 = vmatpush1.msra.mxu0 0.0
        %2206 = vmatprep.subr.mxu0 0.0
        %2207 = vmatpush1.msra.mxu0 0.0
        %2208 = vmatprep.subr.mxu0 0.0
        %2209 = vmatpush1.msra.mxu0 0.0
        %2210 = vmatprep.mubr.f32.mxu0 0.0
        %2211 = vmatmul.mubr.f32.gmra.mrb[0].mxu0 %v2091
        %v2212 = vpop.f32.mrb[0].mxu0
        %v2213 = vadd.f32 %v2144, %v2212
        %v2214 = vpop.f32.mrb[0].mxu0
        %2215 = vmatprep.mubr.f32.mxu0 0.0
        %2216 = vmatmul.mubr.f32.gmra.mrb[0].mxu0 %v2092
        %v2217 = vpop.f32.mrb[0].mxu0
        %v2218 = vadd.f32 %v2144, %v2217
        %v2219 = vpop.f32.mrb[0].mxu0
        %2220 = vmatprep.mubr.f32.mxu0 0.0
        %2221 = vmatmul.mubr.f32.gmra.mrb[0].mxu0 %v2093
        %v2222 = vpop.f32.mrb[0].mxu0
        %v2223 = vadd.f32 %v2144, %v2222
        %v2224 = vpop.f32.mrb[0].mxu0
        %2225 = vmatprep.mubr.f32.mxu0 0.0
        %2226 = vmatmul.mubr.f32.gmra.mrb[0].mxu0 %v2094
        %v2227 = vpop.f32.mrb[0].mxu0
        %v2228 = vadd.f32 %v2144, %v2227
        %v2229 = vpop.f32.mrb[0].mxu0
        %2230 = vmatprep.mubr.f32.mxu0 0.0
        %2231 = vmatmul.mubr.f32.gmra.mrb[0].mxu0 %v2095
        %v2232 = vpop.f32.mrb[0].mxu0
        %v2233 = vadd.f32 %v2144, %v2232
        %v2234 = vpop.f32.mrb[0].mxu0
        %2235 = vmatprep.mubr.f32.mxu0 0.0
        %2236 = vmatmul.mubr.f32.gmra.mrb[0].mxu0 %v2096
        %v2237 = vpop.f32.mrb[0].mxu0
        %v2238 = vadd.f32 %v2144, %v2237
        %v2239 = vpop.f32.mrb[0].mxu0
        %2240 = vmatprep.mubr.f32.mxu0 0.0
        %2241 = vmatmul.mubr.f32.gmra.mrb[0].mxu0 %v2097
        %v2242 = vpop.f32.mrb[0].mxu0
        %v2243 = vadd.f32 %v2144, %v2242
        %v2244 = vpop.f32.mrb[0].mxu0
        %2245 = vmatprep.mubr.f32.mxu0 0.0
        %2246 = vmatmul.mubr.f32.gmra.mrb[0].mxu0 %v2098
        %v2247 = vpop.f32.mrb[0].mxu0
        %v2248 = vadd.f32 %v2144, %v2247
        %v2249 = vpop.f32.mrb[0].mxu0
        %2250 = vmatprep.mubr.f32.mxu0 0.0
        %2251 = vmatmul.mubr.f32.gmra.mrb[0].mxu0 %v2099
        %v2252 = vpop.f32.mrb[0].mxu0
        %v2253 = vadd.f32 %v2144, %v2252
        %v2254 = vpop.f32.mrb[0].mxu0
        %2255 = vmatprep.mubr.f32.mxu0 0.0
        %2256 = vmatmul.mubr.f32.gmra.mrb[0].mxu0 %v2100
        %v2257 = vpop.f32.mrb[0].mxu0
        %v2258 = vadd.f32 %v2144, %v2257
        %v2259 = vpop.f32.mrb[0].mxu0
        %2260 = vmatprep.mubr.f32.mxu0 0.0
        %2261 = vmatmul.mubr.f32.gmra.mrb[0].mxu0 %v2101
        %v2262 = vpop.f32.mrb[0].mxu0
        %v2263 = vadd.f32 %v2144, %v2262
        %v2264 = vpop.f32.mrb[0].mxu0
        %2265 = vmatprep.mubr.f32.mxu0 0.0
        %2266 = vmatmul.mubr.f32.gmra.mrb[0].mxu0 %v2102
        %v2267 = vpop.f32.mrb[0].mxu0
        %v2268 = vadd.f32 %v2144, %v2267
        %v2269 = vpop.f32.mrb[0].mxu0
        %2270 = vmatprep.mubr.f32.mxu0 0.0
        %2271 = vmatmul.mubr.f32.gmra.mrb[0].mxu0 %v2103
        %v2272 = vpop.f32.mrb[0].mxu0
        %v2273 = vadd.f32 %v2144, %v2272
        %v2274 = vpop.f32.mrb[0].mxu0
        %2275 = vmatprep.mubr.f32.mxu0 0.0
        %2276 = vmatmul.mubr.f32.gmra.mrb[0].mxu0 %v2104
        %v2277 = vpop.f32.mrb[0].mxu0
        %v2278 = vadd.f32 %v2144, %v2277
        %v2279 = vpop.f32.mrb[0].mxu0
        %2280 = vmatprep.mubr.f32.mxu0 0.0
        %2281 = vmatmul.mubr.f32.gmra.mrb[0].mxu0 %v2105
        %v2282 = vpop.f32.mrb[0].mxu0
        %v2283 = vadd.f32 %v2144, %v2282
        %v2284 = vpop.f32.mrb[0].mxu0
        %2285 = vmatprep.mubr.f32.mxu0 0.0
        %2286 = vmatmul.mubr.f32.gmra.mrb[0].mxu0 %v2106
        %v2287 = vpop.f32.mrb[0].mxu0
        %v2288 = vadd.f32 %v2144, %v2287
        %v2289 = vpop.f32.mrb[0].mxu0
        %2290 = vmatprep.mubr.f32.mxu0 0.0
        %2291 = vmatmul.mubr.f32.gmra.mrb[0].mxu0 %v2107
        %v2292 = vpop.f32.mrb[0].mxu0
        %v2293 = vadd.f32 %v2144, %v2292
        %v2294 = vpop.f32.mrb[0].mxu0
        %2295 = vmatprep.mubr.f32.mxu0 0.0
        %2296 = vmatmul.mubr.f32.gmra.mrb[0].mxu0 %v2108
        %v2297 = vpop.f32.mrb[0].mxu0
        %v2298 = vadd.f32 %v2144, %v2297
        %v2299 = vpop.f32.mrb[0].mxu0
        %2300 = vmatprep.mubr.f32.mxu0 0.0
        %2301 = vmatmul.mubr.f32.gmra.mrb[0].mxu0 %v2109
        %v2302 = vpop.f32.mrb[0].mxu0
        %v2303 = vadd.f32 %v2144, %v2302
        %v2304 = vpop.f32.mrb[0].mxu0
        %2305 = vmatprep.mubr.f32.mxu0 0.0
        %2306 = vmatmul.mubr.f32.gmra.mrb[0].mxu0 %v2110
        %v2307 = vpop.f32.mrb[0].mxu0
        %v2308 = vadd.f32 %v2144, %v2307
        %v2309 = vpop.f32.mrb[0].mxu0
        %2310 = vmatprep.mubr.f32.mxu0 0.0
        %2311 = vmatmul.mubr.f32.gmra.mrb[0].mxu0 %v2111
        %v2312 = vpop.f32.mrb[0].mxu0
        %v2313 = vadd.f32 %v2144, %v2312
        %v2314 = vpop.f32.mrb[0].mxu0
        %2315 = vmatprep.mubr.f32.mxu0 0.0
        %2316 = vmatmul.mubr.f32.gmra.mrb[0].mxu0 %v2112
        %v2317 = vpop.f32.mrb[0].mxu0
        %v2318 = vadd.f32 %v2144, %v2317
        %v2319 = vpop.f32.mrb[0].mxu0
        %2320 = vmatprep.mubr.f32.mxu0 0.0
        %2321 = vmatmul.mubr.f32.gmra.mrb[0].mxu0 %v2113
        %v2322 = vpop.f32.mrb[0].mxu0
        %v2323 = vadd.f32 %v2144, %v2322
        %v2324 = vpop.f32.mrb[0].mxu0
        %2325 = vmatprep.mubr.f32.mxu0 0.0
        %2326 = vmatmul.mubr.f32.gmra.mrb[0].mxu0 %v2114
        %v2327 = vpop.f32.mrb[0].mxu0
        %v2328 = vadd.f32 %v2144, %v2327
        %v2329 = vpop.f32.mrb[0].mxu0
        %2330 = vmatprep.mubr.f32.mxu0 0.0
        %2331 = vmatmul.mubr.f32.gmra.mrb[0].mxu0 %v2115
        %v2332 = vpop.f32.mrb[0].mxu0
        %v2333 = vadd.f32 %v2144, %v2332
        %v2334 = vpop.f32.mrb[0].mxu0
        %2335 = vmatprep.mubr.f32.mxu0 0.0
        %2336 = vmatmul.mubr.f32.gmra.mrb[0].mxu0 %v2116
        %v2337 = vpop.f32.mrb[0].mxu0
        %v2338 = vadd.f32 %v2144, %v2337
        %v2339 = vpop.f32.mrb[0].mxu0
        %2340 = vmatprep.mubr.f32.mxu0 0.0
        %2341 = vmatmul.mubr.f32.gmra.mrb[0].mxu0 %v2117
        %v2342 = vpop.f32.mrb[0].mxu0
        %v2343 = vadd.f32 %v2144, %v2342
        %v2344 = vpop.f32.mrb[0].mxu0
        %2345 = vmatprep.mubr.f32.mxu0 0.0
        %2346 = vmatmul.mubr.f32.gmra.mrb[0].mxu0 %v2118
        %v2347 = vpop.f32.mrb[0].mxu0
        %v2348 = vadd.f32 %v2144, %v2347
        %v2349 = vpop.f32.mrb[0].mxu0
        %2350 = vmatprep.mubr.f32.mxu0 0.0
        %2351 = vmatmul.mubr.f32.gmra.mrb[0].mxu0 %v2119
        %v2352 = vpop.f32.mrb[0].mxu0
        %v2353 = vadd.f32 %v2144, %v2352
        %v2354 = vpop.f32.mrb[0].mxu0
        %2355 = vmatprep.mubr.f32.mxu0 0.0
        %2356 = vmatmul.mubr.f32.gmra.mrb[0].mxu0 %v2120
        %v2357 = vpop.f32.mrb[0].mxu0
        %v2358 = vadd.f32 %v2144, %v2357
        %v2359 = vpop.f32.mrb[0].mxu0
        %2360 = vmatprep.mubr.f32.mxu0 0.0
        %2361 = vmatmul.mubr.f32.gmra.mrb[0].mxu0 %v2121
        %v2362 = vpop.f32.mrb[0].mxu0
        %v2363 = vadd.f32 %v2144, %v2362
        %v2364 = vpop.f32.mrb[0].mxu0
        %2365 = vmatprep.mubr.f32.mxu0 0.0
        %2366 = vmatmul.mubr.f32.gmra.mrb[0].mxu0 %v2122
        %v2367 = vpop.f32.mrb[0].mxu0
        %v2368 = vadd.f32 %v2144, %v2367
        %v2369 = vpop.f32.mrb[0].mxu0
        %2370 = vdwg.mxu0
        %v2371 = vld [vmem:[%s834 + $0x1] sm:$0xff]
        %v2372 = vld [vmem:[%s834 + $0x9] sm:$0xff]
        %v2373 = vld [vmem:[%s834 + $0x19] sm:$0xff]
        %v2374 = vld [vmem:[%s834 + $0x21] sm:$0xff]
        %v2375 = vld [vmem:[%s834 + $0x31] sm:$0xff]
        %v2376 = vld [vmem:[%s834 + $0x39] sm:$0xff]
        %v2377 = vld [vmem:[%s834 + $0x49] sm:$0xff]
        %v2378 = vld [vmem:[%s834 + $0x51] sm:$0xff]
        %v2379 = vld [vmem:[%s834 + $0x61] sm:$0xff]
        %v2380 = vld [vmem:[%s834 + $0x69] sm:$0xff]
        %v2381 = vld [vmem:[%s834 + $0x79] sm:$0xff]
        %v2382 = vld [vmem:[%s834 + $0x81] sm:$0xff]
        %v2383 = vld [vmem:[%s834 + $0x91] sm:$0xff]
        %v2384 = vld [vmem:[%s834 + $0x99] sm:$0xff]
        %v2385 = vld [vmem:[%s834 + $0xa9] sm:$0xff]
        %v2386 = vld [vmem:[%s834 + $0xb1] sm:$0xff]
        %v2387 = vld [vmem:[%s834 + $0xc1] sm:$0xff]
        %v2388 = vld [vmem:[%s834 + $0xc9] sm:$0xff]
        %v2389 = vld [vmem:[%s834 + $0xd9] sm:$0xff]
        %v2390 = vld [vmem:[%s834 + $0xe1] sm:$0xff]
        %v2391 = vld [vmem:[%s834 + $0xf1] sm:$0xff]
        %v2392 = vld [vmem:[%s834 + $0xf9] sm:$0xff]
        %v2393 = vld [vmem:[%s834 + $0x109] sm:$0xff]
        %v2394 = vld [vmem:[%s834 + $0x111] sm:$0xff]
        %v2395 = vld [vmem:[%s834 + $0x121] sm:$0xff]
        %v2396 = vld [vmem:[%s834 + $0x129] sm:$0xff]
        %v2397 = vld [vmem:[%s834 + $0x139] sm:$0xff]
        %v2398 = vld [vmem:[%s834 + $0x141] sm:$0xff]
        %v2399 = vld [vmem:[%s834 + $0x151] sm:$0xff]
        %v2400 = vld [vmem:[%s834 + $0x159] sm:$0xff]
        %v2401 = vld [vmem:[%s834 + $0x169] sm:$0xff]
        %v2402 = vld [vmem:[%s834 + $0x171] sm:$0xff]
        %v2403 = vadd.f32 %v2213, %v2371
        %v2404 = vadd.f32 %v2218, %v2372
        %v2405 = vadd.f32 %v2223, %v2373
        %v2406 = vadd.f32 %v2228, %v2374
        %v2407 = vadd.f32 %v2233, %v2375
        %v2408 = vadd.f32 %v2238, %v2376
        %v2409 = vadd.f32 %v2243, %v2377
        %v2410 = vadd.f32 %v2248, %v2378
        %v2411 = vadd.f32 %v2253, %v2379
        %v2412 = vadd.f32 %v2258, %v2380
        %v2413 = vadd.f32 %v2263, %v2381
        %v2414 = vadd.f32 %v2268, %v2382
        %v2415 = vadd.f32 %v2273, %v2383
        %v2416 = vadd.f32 %v2278, %v2384
        %v2417 = vadd.f32 %v2283, %v2385
        %v2418 = vadd.f32 %v2288, %v2386
        %v2419 = vadd.f32 %v2293, %v2387
        %v2420 = vadd.f32 %v2298, %v2388
        %v2421 = vadd.f32 %v2303, %v2389
        %v2422 = vadd.f32 %v2308, %v2390
        %v2423 = vadd.f32 %v2313, %v2391
        %v2424 = vadd.f32 %v2318, %v2392
        %v2425 = vadd.f32 %v2323, %v2393
        %v2426 = vadd.f32 %v2328, %v2394
        %v2427 = vadd.f32 %v2333, %v2395
        %v2428 = vadd.f32 %v2338, %v2396
        %v2429 = vadd.f32 %v2343, %v2397
        %v2430 = vadd.f32 %v2348, %v2398
        %v2431 = vadd.f32 %v2353, %v2399
        %v2432 = vadd.f32 %v2358, %v2400
        %v2433 = vadd.f32 %v2363, %v2401
        %v2434 = vadd.f32 %v2368, %v2402
        %2435 = vst [vmem:[%s244] sm:$0xff] %v2403
        %2436 = vst [vmem:[%s244 + $0x8] sm:$0xff] %v2404
        %2437 = vst [vmem:[%s244 + $0x10] sm:$0xff] %v2405
        %2438 = vst [vmem:[%s244 + $0x18] sm:$0xff] %v2406
        %2439 = vst [vmem:[%s244 + $0x20] sm:$0xff] %v2407
        %2440 = vst [vmem:[%s244 + $0x28] sm:$0xff] %v2408
        %2441 = vst [vmem:[%s244 + $0x30] sm:$0xff] %v2409
        %2442 = vst [vmem:[%s244 + $0x38] sm:$0xff] %v2410
        %2443 = vst [vmem:[%s244 + $0x40] sm:$0xff] %v2411
        %2444 = vst [vmem:[%s244 + $0x48] sm:$0xff] %v2412
        %2445 = vst [vmem:[%s244 + $0x50] sm:$0xff] %v2413
        %2446 = vst [vmem:[%s244 + $0x58] sm:$0xff] %v2414
        %2447 = vst [vmem:[%s244 + $0x60] sm:$0xff] %v2415
        %2448 = vst [vmem:[%s244 + $0x68] sm:$0xff] %v2416
        %2449 = vst [vmem:[%s244 + $0x70] sm:$0xff] %v2417
        %2450 = vst [vmem:[%s244 + $0x78] sm:$0xff] %v2418
        %2451 = vst [vmem:[%s244 + $0x80] sm:$0xff] %v2419
        %2452 = vst [vmem:[%s244 + $0x88] sm:$0xff] %v2420
        %2453 = vst [vmem:[%s244 + $0x90] sm:$0xff] %v2421
        %2454 = vst [vmem:[%s244 + $0x98] sm:$0xff] %v2422
        %2455 = vst [vmem:[%s244 + $0xa0] sm:$0xff] %v2423
        %2456 = vst [vmem:[%s244 + $0xa8] sm:$0xff] %v2424
        %2457 = vst [vmem:[%s244 + $0xb0] sm:$0xff] %v2425
        %2458 = vst [vmem:[%s244 + $0xb8] sm:$0xff] %v2426
        %2459 = vst [vmem:[%s244 + $0xc0] sm:$0xff] %v2427
        %2460 = vst [vmem:[%s244 + $0xc8] sm:$0xff] %v2428
        %2461 = vst [vmem:[%s244 + $0xd0] sm:$0xff] %v2429
        %2462 = vst [vmem:[%s244 + $0xd8] sm:$0xff] %v2430
        %2463 = vst [vmem:[%s244 + $0xe0] sm:$0xff] %v2431
        %2464 = vst [vmem:[%s244 + $0xe8] sm:$0xff] %v2432
        %2465 = vst [vmem:[%s244 + $0xf0] sm:$0xff] %v2433
        %2466 = vst [vmem:[%s244 + $0xf8] sm:$0xff] %v2434
        %s2467 = sand.u32 %s153, 1
        %s2468 = scalar_lea.sflag [#allocation3], %s2467
        %s2469 = sand.u32 %s153, 1
        %s2470 = smul.addr %s2469, 256
        %s2471 = scalar_lea.vmem [#allocation2], %s2470
        // Predicated region
        $region41: #{tpu_custom_call.1} parent=39 // pred_check
          %p2472 = pneg %p163
        $region42: #{tpu_custom_call.1} parent=39 // pred_check_branch
          %2474 = sbr.rel (%p2472) target = $region44
        $region43: #{tpu_custom_call.1} parent=39 // pred_region
          %s2475 = smul.u32 16, %s24
          %s2477 = ssub.s32 4096, 4096
          %2478 = vsyncadd %s2468, %s2477
          %s2479 = smul.addr %s2475, 2
          %s2480 = smul.addr %s23, 32
          %s2481 = sadd.s32 %s2479, %s2480
          %s2482 = smul.addr %s2481, 128
          %s2483 = scalar_lea.hbm %s5, %s2482
          %s2484 = sshll.u32 %s2471, 4
          %s2485 = int_to_ptr.vmem [resolvable:$true] %s2484
          %2490 = dma.vmem_to_hbm [thread:$0]  %s2485, 4096, %s2483, %s2468, 128, 128, 8
        $region44: #{tpu_custom_call.1} parent=39 // pred_fallthru
          _
      $region40: #{tpu_custom_call.1} parent=5 // pred_fallthru
        _
      %p2491 = scmp.le.s32.totalorder 2, %s14
      // Predicated region
      $region45: #{tpu_custom_call.1} parent=5 // pred_check
        %p2492 = pneg %p2491
      $region46: #{tpu_custom_call.1} parent=5 // pred_check_branch
        %2494 = sbr.rel (%p2492) target = $region48
      $region47: #{tpu_custom_call.1} parent=5 // pred_region
        %s2495 = ssub.s32 %s14, 2
        // Predicated region
        $region49: #{tpu_custom_call.1} parent=47 // pred_check
          %p2496 = pneg %p169
        $region50: #{tpu_custom_call.1} parent=47 // pred_check_branch
          %2498 = sbr.rel (%p2496) target = $region52
        $region51: #{tpu_custom_call.1} parent=47 // pred_region
          %s2499 = sand.u32 %s154, 1
          %s2500 = scalar_lea.sflag [#allocation3], %s2499
          %s2501 = sand.u32 %s154, 1
          %s2502 = smul.addr %s2501, 256
          %s2503 = scalar_lea.vmem [#allocation2], %s2502
          %2504 = dma.done %s2500, 4096
        $region52: #{tpu_custom_call.1} parent=47 // pred_fallthru
          _
      $region48: #{tpu_custom_call.1} parent=5 // pred_fallthru
        _
    $region6: #{tpu_custom_call.1} parent=1 // loop_footer
      %s18 = sadd.s32 1, %s14
    $region7: #{tpu_custom_call.1} parent=1 // loop_footer_branch
      %13 = sbr.rel target = $region3
    $region8: #{tpu_custom_call.1} parent=1 // loop_exit
      _
    %2505 = vsyncpa [#allocation3], 1
    %s2506 = scalar_lea.sflag [#allocation3], 1
    %2507 = vsyncpa %s2506, 1

</llo_original>
